<compile_context>
chip_gen: v7x
topology: tpu7x:2x2x1
jax: 0.10.0
libtpu: 0.0.40
codegen_flags: <defaults>
</compile_context>

<pallas_src>
import functools

import jax
import jax.numpy as jnp
from jax.experimental import pallas as pl
from jax.experimental.pallas import tpu as pltpu


def _round_up(x, m):
    return (x + m - 1) // m * m


def _vmem_capacity_bytes():
    try:
        return int(pltpu.get_tpu_info().vmem_capacity_bytes)
    except Exception:
        return 64 * 1024 * 1024        # conservative (v7x); v5e/v6e have 128 MiB


# --------------------------------------------------------------------------
# Conv kernel: manual double-buffered halo slab DMA + scratch-resident im2col
# + one MXU matmul per group, operands streamed from VMEM refs (no spills).
# --------------------------------------------------------------------------
def _bayes_conv2d_kernel(x_hbm, w_ref, b_ref, o_ref, xbuf, col, sem, *,
                         tile_m, slab_w, Wp, KH, KW, dh, dw,
                         groups, icg_pad, ocg, kg):
    # x_hbm : (N, IC_pad, Lflat)     full activations, left in HBM (pl.ANY)
    # w_ref : (tile_oc, kg)          sampled weight block, VMEM
    # b_ref : (tile_oc, 1)           sampled bias block, VMEM
    # o_ref : (tile_oc, tile_m)      output tile (lane-dense: tile_m % 128 == 0)
    # xbuf  : (2, IC_pad, slab_w)    double-buffered activation halo slabs
    # col   : (groups*kg, tile_m)    persistent im2col scratch (built at oc == 0)
    n = pl.program_id(0)
    m = pl.program_id(1)
    oc = pl.program_id(2)
    num_m = pl.num_programs(1)
    slot = m % 2
    col0 = pl.multiple_of(m * tile_m, 128)

    def _slab_copy(col_start, s):
        return pltpu.make_async_copy(
            x_hbm.at[n, :, pl.ds(col_start, slab_w)], xbuf.at[s], sem.at[s])

    # Prime the pipeline at the first m-tile of every batch element (safe under
    # megacore splitting of the batch axis: every core primes its own m == 0).
    @pl.when(jnp.logical_and(m == 0, oc == 0))
    def _():
        _slab_copy(col0, slot).start()

    # Once per (n, m): finish this tile's slab DMA, prefetch the next tile's
    # slab (overlaps all compute below, including all oc steps), and build the
    # tap-fused im2col operand in VMEM scratch.
    @pl.when(oc == 0)
    def _():
        _slab_copy(col0, slot).wait()

        @pl.when(m + 1 < num_m)
        def _():
            _slab_copy(col0 + tile_m, 1 - slot).start()

        # Tap windows are loaded as small (icg_pad, tile_m) values from the
        # slab *ref* (never the whole slab) and stored to sublane-aligned rows
        # of the im2col scratch.
        for g in range(groups):
            for kh in range(KH):
                for kw in range(KW):
                    off = kh * dh * Wp + kw * dw          # flat-index tap offset
                    row = (g * KH * KW + kh * KW + kw) * icg_pad
                    col[row:row + icg_pad, :] = xbuf[
                        slot, g * icg_pad:(g + 1) * icg_pad, off:off + tile_m]

    # One MXU matmul per group; operands stream from VMEM refs directly.
    if groups == 1:
        acc = jnp.dot(w_ref[...], col[...], preferred_element_type=jnp.float32)
        o_ref[...] = (acc + b_ref[...]).astype(o_ref.dtype)
    else:
        for g in range(groups):
            acc = jnp.dot(w_ref[g * ocg:(g + 1) * ocg, :],
                          col[g * kg:(g + 1) * kg, :],
                          preferred_element_type=jnp.float32)
            o_ref[g * ocg:(g + 1) * ocg, :] = (
                acc + b_ref[g * ocg:(g + 1) * ocg, :]).astype(o_ref.dtype)


# --------------------------------------------------------------------------
# Wrapper (layout glue: fused padding, chip-derived tiling, stride epilogue)
# --------------------------------------------------------------------------
def bayes_conv2d(x, weight_mu, weight_sigma, weight_eps,
                 bias_mu, bias_sigma, bias_eps,
                 stride=(1, 1), padding=(1, 1), dilation=(1, 1), groups=1,
                 tile_m=None):
    N, IC, H, W = x.shape
    OC, ICg, KH, KW = weight_mu.shape
    sh, sw = stride
    ph, pw = padding
    dh, dw = dilation
    assert IC == ICg * groups and OC % groups == 0
    OCg = OC // groups

    Hp, Wp = H + 2 * ph, W + 2 * pw
    OH1 = Hp - dh * (KH - 1)             # stride-1 output height
    OW1 = Wp - dw * (KW - 1)             # stride-1 output width
    assert OH1 >= 1 and OW1 >= 1

    ICg_pad = _round_up(ICg, 8)          # sublane-aligned per-group channels
    IC_pad = groups * ICg_pad
    Kg = KH * KW * ICg_pad               # per-group contraction length

    M_need = OH1 * Wp                    # stride-1 flat outputs (incl. wrap cols)
    halo = (KH - 1) * dh * Wp + (KW - 1) * dw

    # ---- chip-derived VMEM budget (v5e/v6e: 128 MiB, v7x: 64 MiB) ----
    vmem_cap = _vmem_capacity_bytes()
    budget = int(vmem_cap * 0.70)        # data budget; rest = compiler scratch

    # ---- OC tiling (groups == 1 only): bound the resident weight block ----
    if groups == 1:
        OC_pad = _round_up(OC, 8)
        if OC_pad * Kg * 4 > budget // 3:
            tile_oc = max(8, min(OC_pad, (budget // 3) // (2 * Kg * 4) // 8 * 8))
            OC_pad = _round_up(OC_pad, tile_oc)
        else:
            tile_oc = OC_pad
    else:
        OC_pad = OC                      # keep group-contiguous weight rows
        tile_oc = OC_pad
    num_oc = OC_pad // tile_oc
    resident_w = (num_oc == 1)           # constant index map -> single-buffer

    # ---- halo-aware, VMEM-bounded tile_m over the flat stride-1 output ----
    if tile_m is None:
        w_vmem = (1 if resident_w else 2) * tile_oc * Kg * 4 + tile_oc * 128 * 4
        fixed = 2 * IC_pad * (halo + 256) * 4 + w_vmem
        per_m = (2 * IC_pad + groups * Kg + 2 * tile_oc) * 4
        tile_max = max(128, (budget - fixed) // per_m // 128 * 128)
        target = _round_up(max(512, 8 * halo), 128)   # keep halo re-fetch small
        tile_m = max(128, min(tile_max, target, _round_up(M_need, 128)))
    assert tile_m % 128 == 0

    num_m = -(-M_need // tile_m)
    Mtot = num_m * tile_m
    slab_w = _round_up(tile_m + halo, 128)
    Lx = (num_m - 1) * tile_m + slab_w   # max flat index any slab DMA touches

    # ---- activations: ONE fused pad (channels + spatial + flat tail) ----
    extra_rows = -(-max(0, Lx - Hp * Wp) // Wp)
    if groups == 1:
        xp = jnp.pad(x, ((0, 0), (0, IC_pad - IC),
                         (ph, ph + extra_rows), (pw, pw)))
        x_flat = xp.reshape(N, IC_pad, (Hp + extra_rows) * Wp)
    else:
        xg = x.reshape(N, groups, ICg, H, W)
        xg = jnp.pad(xg, ((0, 0), (0, 0), (0, ICg_pad - ICg),
                          (ph, ph + extra_rows), (pw, pw)))
        x_flat = xg.reshape(N, IC_pad, (Hp + extra_rows) * Wp)

    # ---- reparameterization sampling in plain jnp (fuses with layout prep) ----
    w_sample = weight_mu + weight_eps * jnp.maximum(weight_sigma, 2.0 ** -30)
    b_sample = bias_mu + jnp.maximum(bias_sigma, 2.0 ** -30) * bias_eps

    w2 = jnp.transpose(w_sample, (0, 2, 3, 1))                  # (OC, KH, KW, ICg)
    w2 = jnp.pad(w2, ((0, OC_pad - OC), (0, 0), (0, 0), (0, ICg_pad - ICg)))
    w2 = w2.reshape(OC_pad, Kg)
    b2 = jnp.pad(b_sample, ((0, OC_pad - OC),)).reshape(OC_pad, 1)

    kernel = functools.partial(
        _bayes_conv2d_kernel, tile_m=tile_m, slab_w=slab_w, Wp=Wp,
        KH=KH, KW=KW, dh=dh, dw=dw, groups=groups,
        icg_pad=ICg_pad, ocg=OCg, kg=Kg)

    def _const_spec(shape, index_map, single_buffer):
        if single_buffer:
            try:   # single-buffer grid-invariant operands (halves their VMEM)
                return pl.BlockSpec(shape, index_map, pipeline_mode=pl.Buffered(1))
            except Exception:
                pass
        return pl.BlockSpec(shape, index_map)

    def _call(single_buffer_consts):
        sb = single_buffer_consts and resident_w
        return pl.pallas_call(
            kernel,
            out_shape=jax.ShapeDtypeStruct((N, OC_pad, Mtot), x.dtype),
            grid=(N, num_m, num_oc),
            in_specs=[
                pl.BlockSpec(memory_space=pl.ANY),               # acts stay in HBM
                _const_spec((tile_oc, Kg), lambda n, m, oc: (oc, 0), sb),
                _const_spec((tile_oc, 1), lambda n, m, oc: (oc, 0), sb),
            ],
            out_specs=pl.BlockSpec((None, tile_oc, tile_m),
                                   lambda n, m, oc: (n, oc, m)),
            scratch_shapes=[
                pltpu.VMEM((2, IC_pad, slab_w), x_flat.dtype),    # halo slabs
                pltpu.VMEM((groups * Kg, tile_m), x_flat.dtype),  # im2col operand
                pltpu.SemaphoreType.DMA((2,)),
            ],
            compiler_params=pltpu.CompilerParams(
                dimension_semantics=("parallel", "arbitrary", "arbitrary"),
                vmem_limit_bytes=int(vmem_cap * 0.9)),
        )(x_flat, w2, b2)

    try:
        out_flat = _call(True)
    except Exception:
        # Fallback if pl.Buffered(1) single-buffering is rejected by this
        # jax/Mosaic version; default double-buffered specs are always valid.
        out_flat = _call(False)

    # ---- epilogue: drop padded OC rows / wrap columns, apply stride ----
    out = out_flat[:, :OC, :OH1 * Wp].reshape(N, OC, OH1, Wp)[:, :, :, :OW1]
    # TODO(synk): stride>1 is applied by subsampling the stride-1 result here;
    # an in-kernel strided output would need a phase-decomposed index mapping.
    return out[:, :, ::sh, ::sw]


# --------------------------------------------------------------------------
# Deterministic parameter init (mirrors _BayesConvNd.reset_parameters, prior=True)
# --------------------------------------------------------------------------
def _sigma_from_power_of_two_distance(w):
    pow2u = jnp.sign(w) * 2.0 ** jnp.ceil(jnp.log2(jnp.abs(w)))
    pow2d = jnp.sign(w) * 2.0 ** jnp.floor(jnp.log2(jnp.abs(w)))
    rel_u = jnp.abs((w - pow2u) / w)
    rel_d = jnp.abs((w - pow2d) / w)
    rel = rel_d * rel_u
    q75 = jnp.quantile(rel, 0.75)
    return jnp.clip(0.0025 * (rel / q75), 2.0 ** -30, 0.05)


if __name__ == "__main__":
    key = jax.random.PRNGKey(0)
    k_wmu, k_bmu, k_x, k_weps, k_beps = jax.random.split(key, 5)

    # BayesConv2d(prior_mu=0.0, prior_sigma=0.1, in_channels=4, out_channels=8,
    #             kernel_size=3, stride=1, padding=1, bias=True)
    N, IC, H, W = 2, 4, 16, 16
    OC, KH, KW = 8, 3, 3
    stride, padding, dilation, groups = (1, 1), (1, 1), (1, 1), 1

    weight_mu = 0.0001 * jax.random.normal(k_wmu, (OC, IC // groups, KH, KW), jnp.float32)
    weight_sigma = _sigma_from_power_of_two_distance(weight_mu)
    bias_mu = 1e-05 * jax.random.normal(k_bmu, (OC,), jnp.float32)
    bias_sigma = _sigma_from_power_of_two_distance(bias_mu)

    x = jax.random.normal(k_x, (N, IC, H, W), jnp.float32)
    # eps ~ N(0,1) (PyTorch draws these with torch.randn_like each forward)
    weight_eps = jax.random.normal(k_weps, (OC, IC // groups, KH, KW), jnp.float32)
    bias_eps = jax.random.normal(k_beps, (OC,), jnp.float32)

    out = bayes_conv2d(x, weight_mu, weight_sigma, weight_eps,
                       bias_mu, bias_sigma, bias_eps,
                       stride=stride, padding=padding, dilation=dilation, groups=groups)
    out = jax.block_until_ready(out)
    assert out.shape == (N, OC, H, W)

    # reference (plain JAX) with identical sampled weights
    w_ref = weight_mu + weight_eps * jnp.maximum(weight_sigma, 2.0 ** -30)
    b_ref = bias_mu + jnp.maximum(bias_sigma, 2.0 ** -30) * bias_eps
    ref = jax.lax.conv_general_dilated(
        x, w_ref, window_strides=stride,
        padding=((padding[0], padding[0]), (padding[1], padding[1])),
        rhs_dilation=dilation, feature_group_count=groups,
        dimension_numbers=("NCHW", "OIHW", "NCHW"))
    ref = ref + b_ref[None, :, None, None]
    assert jnp.allclose(out, ref, atol=1e-5, rtol=1e-4)

    print("KERNEL_OK")
</pallas_src>

<mosaic_0001>
module attributes {stable_mosaic.version = 11 : i64} {
  func.func @_bayes_conv2d_kernel(%arg0: i32, %arg1: i32, %arg2: i32, %arg3: memref<2x8x522xf32, #tpu.memory_space<any>>, %arg4: memref<8x72xf32, #tpu.memory_space<vmem>>, %arg5: memref<8x1xf32, #tpu.memory_space<vmem>>, %arg6: memref<1x8x384xf32, #tpu.memory_space<vmem>>, %arg7: memref<2x8x512xf32, #tpu.memory_space<vmem>>, %arg8: memref<72x384xf32, #tpu.memory_space<vmem>>, %arg9: memref<2x!tpu.dma_semaphore, #tpu.memory_space<semaphore_mem>>) attributes {dimension_semantics = [#tpu.dimension_semantics<parallel>, #tpu.dimension_semantics<arbitrary>, #tpu.dimension_semantics<arbitrary>], iteration_bounds = array<i64: 2, 1, 1>, scalar_prefetch = 0 : i64, scratch_operands = 3 : i64, tpu.core_type = #tpu.core_type<tc>, window_params = [{}, {pipeline_mode = #tpu.pipeline_mode<synchronous>, transform_indices = @transform_1, window_bounds = array<i64: 8, 72>}, {pipeline_mode = #tpu.pipeline_mode<synchronous>, transform_indices = @transform_2, window_bounds = array<i64: 8, 1>}, {transform_indices = @transform_3, window_bounds = array<i64: 1, 8, 384>}]} {
    %c2_i32 = arith.constant 2 : i32
    %c0_i32 = arith.constant 0 : i32
    %0 = arith.cmpi eq, %c2_i32, %c0_i32 : i32
    %c1_i32 = arith.constant 1 : i32
    %1 = arith.select %0, %c1_i32, %c2_i32 : i32
    %2 = arith.remsi %arg1, %1 : i32
    %c0_i32_0 = arith.constant 0 : i32
    %3 = arith.cmpi ne, %2, %c0_i32_0 : i32
    %c0_i32_1 = arith.constant 0 : i32
    %4 = arith.cmpi slt, %2, %c0_i32_1 : i32
    %c0_i32_2 = arith.constant 0 : i32
    %5 = arith.cmpi slt, %1, %c0_i32_2 : i32
    %6 = arith.xori %4, %5 : i1
    %7 = arith.andi %6, %3 : i1
    %8 = arith.addi %2, %1 : i32
    %9 = arith.select %7, %8, %2 : i32
    %c384_i32 = arith.constant 384 : i32
    %10 = arith.muli %arg1, %c384_i32 : i32
    %11 = tpu.assume_multiple %10, 128 : i32
    %c0_i32_3 = arith.constant 0 : i32
    %12 = arith.cmpi eq, %arg1, %c0_i32_3 : i32
    %c0_i32_4 = arith.constant 0 : i32
    %13 = arith.cmpi eq, %arg2, %c0_i32_4 : i32
    %14 = arith.andi %12, %13 : i1
    %15 = arith.extui %14 : i1 to i32
    %c0_i32_5 = arith.constant 0 : i32
    %16 = arith.cmpi ne, %15, %c0_i32_5 : i32
    scf.if %16 {
      %c0_i32_16 = arith.constant 0 : i32
      %29 = tpu.memref_slice %arg3[%arg0, %c0_i32_16, %11] : memref<2x8x522xf32, #tpu.memory_space<any>> -> memref<1x8x512xf32, #tpu.memory_space<any>>
      %30 = tpu.memref_squeeze %29 : memref<1x8x512xf32, #tpu.memory_space<any>> -> memref<8x512xf32, #tpu.memory_space<any>>
      %c0_i32_17 = arith.constant 0 : i32
      %c0_i32_18 = arith.constant 0 : i32
      %31 = tpu.memref_slice %arg7[%9, %c0_i32_17, %c0_i32_18] : memref<2x8x512xf32, #tpu.memory_space<vmem>> -> memref<1x8x512xf32, #tpu.memory_space<vmem>>
      %32 = tpu.memref_squeeze %31 : memref<1x8x512xf32, #tpu.memory_space<vmem>> -> memref<8x512xf32, #tpu.memory_space<vmem>>
      %33 = tpu.memref_slice %arg9[%9] : memref<2x!tpu.dma_semaphore, #tpu.memory_space<semaphore_mem>> -> memref<1x!tpu.dma_semaphore, #tpu.memory_space<semaphore_mem>>
      %34 = tpu.memref_squeeze %33 : memref<1x!tpu.dma_semaphore, #tpu.memory_space<semaphore_mem>> -> memref<!tpu.dma_semaphore, #tpu.memory_space<semaphore_mem>>
      tpu.enqueue_dma source(%30 : memref<8x512xf32, #tpu.memory_space<any>>) target(%32 : memref<8x512xf32, #tpu.memory_space<vmem>>) target_semaphore(%34 : memref<!tpu.dma_semaphore, #tpu.memory_space<semaphore_mem>>)
    } else {
    }
    %c0_i32_6 = arith.constant 0 : i32
    %17 = arith.cmpi eq, %arg2, %c0_i32_6 : i32
    %18 = arith.extui %17 : i1 to i32
    %c0_i32_7 = arith.constant 0 : i32
    %19 = arith.cmpi ne, %18, %c0_i32_7 : i32
    scf.if %19 {
      %c0_i32_16 = arith.constant 0 : i32
      %29 = tpu.memref_slice %arg3[%arg0, %c0_i32_16, %11] : memref<2x8x522xf32, #tpu.memory_space<any>> -> memref<1x8x512xf32, #tpu.memory_space<any>>
      %30 = tpu.memref_squeeze %29 : memref<1x8x512xf32, #tpu.memory_space<any>> -> memref<8x512xf32, #tpu.memory_space<any>>
      %c0_i32_17 = arith.constant 0 : i32
      %c0_i32_18 = arith.constant 0 : i32
      %31 = tpu.memref_slice %arg7[%9, %c0_i32_17, %c0_i32_18] : memref<2x8x512xf32, #tpu.memory_space<vmem>> -> memref<1x8x512xf32, #tpu.memory_space<vmem>>
      %32 = tpu.memref_squeeze %31 : memref<1x8x512xf32, #tpu.memory_space<vmem>> -> memref<8x512xf32, #tpu.memory_space<vmem>>
      %33 = tpu.memref_slice %arg9[%9] : memref<2x!tpu.dma_semaphore, #tpu.memory_space<semaphore_mem>> -> memref<1x!tpu.dma_semaphore, #tpu.memory_space<semaphore_mem>>
      %34 = tpu.memref_squeeze %33 : memref<1x!tpu.dma_semaphore, #tpu.memory_space<semaphore_mem>> -> memref<!tpu.dma_semaphore, #tpu.memory_space<semaphore_mem>>
      tpu.wait_dma2 semaphore(%34 : memref<!tpu.dma_semaphore, #tpu.memory_space<semaphore_mem>>) src(%30 : memref<8x512xf32, #tpu.memory_space<any>>) dst(%32 : memref<8x512xf32, #tpu.memory_space<vmem>>)
      %c1_i32_19 = arith.constant 1 : i32
      %35 = arith.addi %arg1, %c1_i32_19 : i32
      %c1_i32_20 = arith.constant 1 : i32
      %36 = arith.cmpi slt, %35, %c1_i32_20 : i32
      %37 = arith.extui %36 : i1 to i32
      %c0_i32_21 = arith.constant 0 : i32
      %38 = arith.cmpi ne, %37, %c0_i32_21 : i32
      scf.if %38 {
        %c384_i32_42 = arith.constant 384 : i32
        %75 = arith.addi %11, %c384_i32_42 : i32
        %c1_i32_43 = arith.constant 1 : i32
        %76 = arith.subi %c1_i32_43, %9 : i32
        %c0_i32_44 = arith.constant 0 : i32
        %77 = tpu.memref_slice %arg3[%arg0, %c0_i32_44, %75] : memref<2x8x522xf32, #tpu.memory_space<any>> -> memref<1x8x512xf32, #tpu.memory_space<any>>
        %78 = tpu.memref_squeeze %77 : memref<1x8x512xf32, #tpu.memory_space<any>> -> memref<8x512xf32, #tpu.memory_space<any>>
        %c0_i32_45 = arith.constant 0 : i32
        %c0_i32_46 = arith.constant 0 : i32
        %79 = tpu.memref_slice %arg7[%76, %c0_i32_45, %c0_i32_46] : memref<2x8x512xf32, #tpu.memory_space<vmem>> -> memref<1x8x512xf32, #tpu.memory_space<vmem>>
        %80 = tpu.memref_squeeze %79 : memref<1x8x512xf32, #tpu.memory_space<vmem>> -> memref<8x512xf32, #tpu.memory_space<vmem>>
        %81 = tpu.memref_slice %arg9[%76] : memref<2x!tpu.dma_semaphore, #tpu.memory_space<semaphore_mem>> -> memref<1x!tpu.dma_semaphore, #tpu.memory_space<semaphore_mem>>
        %82 = tpu.memref_squeeze %81 : memref<1x!tpu.dma_semaphore, #tpu.memory_space<semaphore_mem>> -> memref<!tpu.dma_semaphore, #tpu.memory_space<semaphore_mem>>
        tpu.enqueue_dma source(%78 : memref<8x512xf32, #tpu.memory_space<any>>) target(%80 : memref<8x512xf32, #tpu.memory_space<vmem>>) target_semaphore(%82 : memref<!tpu.dma_semaphore, #tpu.memory_space<semaphore_mem>>)
      } else {
      }
      %39 = arith.index_cast %9 : i32 to index
      %c0_22 = arith.constant 0 : index
      %c0_23 = arith.constant 0 : index
      %40 = vector.load %arg7[%39, %c0_22, %c0_23] : memref<2x8x512xf32, #tpu.memory_space<vmem>>, vector<1x8x384xf32>
      %41 = vector.shape_cast %40 : vector<1x8x384xf32> to vector<8x384xf32>
      %c0_24 = arith.constant 0 : index
      %c0_25 = arith.constant 0 : index
      %42 = vector.load %arg8[%c0_24, %c0_25] : memref<72x384xf32, #tpu.memory_space<vmem>>, vector<8x384xf32>
      tpu.vector_store %arg8[%c0_24, %c0_25], %41 {strides = array<i32>} : memref<72x384xf32, #tpu.memory_space<vmem>>, vector<8x384xf32>,
      %43 = arith.index_cast %9 : i32 to index
      %c0_26 = arith.constant 0 : index
      %c1 = arith.constant 1 : index
      %44 = vector.load %arg7[%43, %c0_26, %c1] : memref<2x8x512xf32, #tpu.memory_space<vmem>>, vector<1x8x384xf32>
      %45 = vector.shape_cast %44 : vector<1x8x384xf32> to vector<8x384xf32>
      %c8 = arith.constant 8 : index
      %c0_27 = arith.constant 0 : index
      %46 = vector.load %arg8[%c8, %c0_27] : memref<72x384xf32, #tpu.memory_space<vmem>>, vector<8x384xf32>
      tpu.vector_store %arg8[%c8, %c0_27], %45 {strides = array<i32>} : memref<72x384xf32, #tpu.memory_space<vmem>>, vector<8x384xf32>,
      %47 = arith.index_cast %9 : i32 to index
      %c0_28 = arith.constant 0 : index
      %c2 = arith.constant 2 : index
      %48 = vector.load %arg7[%47, %c0_28, %c2] : memref<2x8x512xf32, #tpu.memory_space<vmem>>, vector<1x8x384xf32>
      %49 = vector.shape_cast %48 : vector<1x8x384xf32> to vector<8x384xf32>
      %c16 = arith.constant 16 : index
      %c0_29 = arith.constant 0 : index
      %50 = vector.load %arg8[%c16, %c0_29] : memref<72x384xf32, #tpu.memory_space<vmem>>, vector<8x384xf32>
      tpu.vector_store %arg8[%c16, %c0_29], %49 {strides = array<i32>} : memref<72x384xf32, #tpu.memory_space<vmem>>, vector<8x384xf32>,
      %51 = arith.index_cast %9 : i32 to index
      %c0_30 = arith.constant 0 : index
      %c18 = arith.constant 18 : index
      %52 = vector.load %arg7[%51, %c0_30, %c18] : memref<2x8x512xf32, #tpu.memory_space<vmem>>, vector<1x8x384xf32>
      %53 = vector.shape_cast %52 : vector<1x8x384xf32> to vector<8x384xf32>
      %c24 = arith.constant 24 : index
      %c0_31 = arith.constant 0 : index
      %54 = vector.load %arg8[%c24, %c0_31] : memref<72x384xf32, #tpu.memory_space<vmem>>, vector<8x384xf32>
      tpu.vector_store %arg8[%c24, %c0_31], %53 {strides = array<i32>} : memref<72x384xf32, #tpu.memory_space<vmem>>, vector<8x384xf32>,
      %55 = arith.index_cast %9 : i32 to index
      %c0_32 = arith.constant 0 : index
      %c19 = arith.constant 19 : index
      %56 = vector.load %arg7[%55, %c0_32, %c19] : memref<2x8x512xf32, #tpu.memory_space<vmem>>, vector<1x8x384xf32>
      %57 = vector.shape_cast %56 : vector<1x8x384xf32> to vector<8x384xf32>
      %c32 = arith.constant 32 : index
      %c0_33 = arith.constant 0 : index
      %58 = vector.load %arg8[%c32, %c0_33] : memref<72x384xf32, #tpu.memory_space<vmem>>, vector<8x384xf32>
      tpu.vector_store %arg8[%c32, %c0_33], %57 {strides = array<i32>} : memref<72x384xf32, #tpu.memory_space<vmem>>, vector<8x384xf32>,
      %59 = arith.index_cast %9 : i32 to index
      %c0_34 = arith.constant 0 : index
      %c20 = arith.constant 20 : index
      %60 = vector.load %arg7[%59, %c0_34, %c20] : memref<2x8x512xf32, #tpu.memory_space<vmem>>, vector<1x8x384xf32>
      %61 = vector.shape_cast %60 : vector<1x8x384xf32> to vector<8x384xf32>
      %c40 = arith.constant 40 : index
      %c0_35 = arith.constant 0 : index
      %62 = vector.load %arg8[%c40, %c0_35] : memref<72x384xf32, #tpu.memory_space<vmem>>, vector<8x384xf32>
      tpu.vector_store %arg8[%c40, %c0_35], %61 {strides = array<i32>} : memref<72x384xf32, #tpu.memory_space<vmem>>, vector<8x384xf32>,
      %63 = arith.index_cast %9 : i32 to index
      %c0_36 = arith.constant 0 : index
      %c36 = arith.constant 36 : index
      %64 = vector.load %arg7[%63, %c0_36, %c36] : memref<2x8x512xf32, #tpu.memory_space<vmem>>, vector<1x8x384xf32>
      %65 = vector.shape_cast %64 : vector<1x8x384xf32> to vector<8x384xf32>
      %c48 = arith.constant 48 : index
      %c0_37 = arith.constant 0 : index
      %66 = vector.load %arg8[%c48, %c0_37] : memref<72x384xf32, #tpu.memory_space<vmem>>, vector<8x384xf32>
      tpu.vector_store %arg8[%c48, %c0_37], %65 {strides = array<i32>} : memref<72x384xf32, #tpu.memory_space<vmem>>, vector<8x384xf32>,
      %67 = arith.index_cast %9 : i32 to index
      %c0_38 = arith.constant 0 : index
      %c37 = arith.constant 37 : index
      %68 = vector.load %arg7[%67, %c0_38, %c37] : memref<2x8x512xf32, #tpu.memory_space<vmem>>, vector<1x8x384xf32>
      %69 = vector.shape_cast %68 : vector<1x8x384xf32> to vector<8x384xf32>
      %c56 = arith.constant 56 : index
      %c0_39 = arith.constant 0 : index
      %70 = vector.load %arg8[%c56, %c0_39] : memref<72x384xf32, #tpu.memory_space<vmem>>, vector<8x384xf32>
      tpu.vector_store %arg8[%c56, %c0_39], %69 {strides = array<i32>} : memref<72x384xf32, #tpu.memory_space<vmem>>, vector<8x384xf32>,
      %71 = arith.index_cast %9 : i32 to index
      %c0_40 = arith.constant 0 : index
      %c38 = arith.constant 38 : index
      %72 = vector.load %arg7[%71, %c0_40, %c38] : memref<2x8x512xf32, #tpu.memory_space<vmem>>, vector<1x8x384xf32>
      %73 = vector.shape_cast %72 : vector<1x8x384xf32> to vector<8x384xf32>
      %c64 = arith.constant 64 : index
      %c0_41 = arith.constant 0 : index
      %74 = vector.load %arg8[%c64, %c0_41] : memref<72x384xf32, #tpu.memory_space<vmem>>, vector<8x384xf32>
      tpu.vector_store %arg8[%c64, %c0_41], %73 {strides = array<i32>} : memref<72x384xf32, #tpu.memory_space<vmem>>, vector<8x384xf32>,
    } else {
    }
    %c0 = arith.constant 0 : index
    %c0_8 = arith.constant 0 : index
    %20 = vector.load %arg4[%c0, %c0_8] : memref<8x72xf32, #tpu.memory_space<vmem>>, vector<8x72xf32>
    %c0_9 = arith.constant 0 : index
    %c0_10 = arith.constant 0 : index
    %21 = vector.load %arg8[%c0_9, %c0_10] : memref<72x384xf32, #tpu.memory_space<vmem>>, vector<72x384xf32>
    %cst = arith.constant dense<0.000000e+00> : vector<8x384xf32>
    %22 = tpu.matmul %20, %21, %cst {dimension_numbers = #tpu.dot_dimension_numbers<[1], [0], [0], [1], [0, 0, 1, 1], [], []>} : vector<8x72xf32>, vector<72x384xf32>, vector<8x384xf32> -> vector<8x384xf32>
    %c0_11 = arith.constant 0 : index
    %c0_12 = arith.constant 0 : index
    %23 = vector.load %arg5[%c0_11, %c0_12] : memref<8x1xf32, #tpu.memory_space<vmem>>, vector<8x1xf32>
    %24 = vector.broadcast %23 : vector<8x1xf32> to vector<8x384xf32>
    %25 = arith.addf %22, %24 : vector<8x384xf32>
    %c0_13 = arith.constant 0 : index
    %c0_14 = arith.constant 0 : index
    %c0_15 = arith.constant 0 : index
    %26 = vector.load %arg6[%c0_13, %c0_14, %c0_15] : memref<1x8x384xf32, #tpu.memory_space<vmem>>, vector<1x8x384xf32>
    %27 = vector.shape_cast %26 : vector<1x8x384xf32> to vector<8x384xf32>
    %28 = vector.shape_cast %25 : vector<8x384xf32> to vector<1x8x384xf32>
    tpu.vector_store %arg6[%c0_13, %c0_14, %c0_15], %28 {strides = array<i32>} : memref<1x8x384xf32, #tpu.memory_space<vmem>>, vector<1x8x384xf32>,
    return
  }
  func.func @transform_1(%arg0: i32, %arg1: i32, %arg2: i32) -> (i32, i32) {
    %c0_i32 = arith.constant 0 : i32
    %c0_i32_0 = arith.constant 0 : i32
    return %arg2, %c0_i32 : i32, i32
  }
  func.func @transform_2(%arg0: i32, %arg1: i32, %arg2: i32) -> (i32, i32) {
    %c0_i32 = arith.constant 0 : i32
    %c0_i32_0 = arith.constant 0 : i32
    return %arg2, %c0_i32 : i32, i32
  }
  func.func @transform_3(%arg0: i32, %arg1: i32, %arg2: i32) -> (i32, i32, i32) {
    %c0_i32 = arith.constant 0 : i32
    return %arg0, %arg2, %arg1 : i32, i32, i32
  }
}

module attributes {stable_mosaic.version = 11 : i64} {
  func.func @_bayes_conv2d_kernel(%arg0: i32, %arg1: i32, %arg2: i32, %arg3: memref<2x8x522xf32, #tpu.memory_space<any>>, %arg4: memref<8x72xf32, #tpu.memory_space<vmem>>, %arg5: memref<8x1xf32, #tpu.memory_space<vmem>>, %arg6: memref<1x8x384xf32, #tpu.memory_space<vmem>>, %arg7: memref<2x8x512xf32, #tpu.memory_space<vmem>>, %arg8: memref<72x384xf32, #tpu.memory_space<vmem>>, %arg9: memref<2x!tpu.dma_semaphore, #tpu.memory_space<semaphore_mem>>) attributes {dimension_semantics = [#tpu.dimension_semantics<parallel>, #tpu.dimension_semantics<arbitrary>, #tpu.dimension_semantics<arbitrary>], iteration_bounds = array<i64: 2, 1, 1>, scalar_prefetch = 0 : i64, scratch_operands = 3 : i64, tpu.core_type = #tpu.core_type<tc>, window_params = [{}, {transform_indices = @transform_1, window_bounds = array<i64: 8, 72>}, {transform_indices = @transform_2, window_bounds = array<i64: 8, 1>}, {transform_indices = @transform_3, window_bounds = array<i64: 1, 8, 384>}]} {
    %c2_i32 = arith.constant 2 : i32
    %c0_i32 = arith.constant 0 : i32
    %0 = arith.cmpi eq, %c2_i32, %c0_i32 : i32
    %c1_i32 = arith.constant 1 : i32
    %1 = arith.select %0, %c1_i32, %c2_i32 : i32
    %2 = arith.remsi %arg1, %1 : i32
    %c0_i32_0 = arith.constant 0 : i32
    %3 = arith.cmpi ne, %2, %c0_i32_0 : i32
    %c0_i32_1 = arith.constant 0 : i32
    %4 = arith.cmpi slt, %2, %c0_i32_1 : i32
    %c0_i32_2 = arith.constant 0 : i32
    %5 = arith.cmpi slt, %1, %c0_i32_2 : i32
    %6 = arith.xori %4, %5 : i1
    %7 = arith.andi %6, %3 : i1
    %8 = arith.addi %2, %1 : i32
    %9 = arith.select %7, %8, %2 : i32
    %c384_i32 = arith.constant 384 : i32
    %10 = arith.muli %arg1, %c384_i32 : i32
    %11 = tpu.assume_multiple %10, 128 : i32
    %c0_i32_3 = arith.constant 0 : i32
    %12 = arith.cmpi eq, %arg1, %c0_i32_3 : i32
    %c0_i32_4 = arith.constant 0 : i32
    %13 = arith.cmpi eq, %arg2, %c0_i32_4 : i32
    %14 = arith.andi %12, %13 : i1
    %15 = arith.extui %14 : i1 to i32
    %c0_i32_5 = arith.constant 0 : i32
    %16 = arith.cmpi ne, %15, %c0_i32_5 : i32
    scf.if %16 {
      %c0_i32_16 = arith.constant 0 : i32
      %29 = tpu.memref_slice %arg3[%arg0, %c0_i32_16, %11] : memref<2x8x522xf32, #tpu.memory_space<any>> -> memref<1x8x512xf32, #tpu.memory_space<any>>
      %30 = tpu.memref_squeeze %29 : memref<1x8x512xf32, #tpu.memory_space<any>> -> memref<8x512xf32, #tpu.memory_space<any>>
      %c0_i32_17 = arith.constant 0 : i32
      %c0_i32_18 = arith.constant 0 : i32
      %31 = tpu.memref_slice %arg7[%9, %c0_i32_17, %c0_i32_18] : memref<2x8x512xf32, #tpu.memory_space<vmem>> -> memref<1x8x512xf32, #tpu.memory_space<vmem>>
      %32 = tpu.memref_squeeze %31 : memref<1x8x512xf32, #tpu.memory_space<vmem>> -> memref<8x512xf32, #tpu.memory_space<vmem>>
      %33 = tpu.memref_slice %arg9[%9] : memref<2x!tpu.dma_semaphore, #tpu.memory_space<semaphore_mem>> -> memref<1x!tpu.dma_semaphore, #tpu.memory_space<semaphore_mem>>
      %34 = tpu.memref_squeeze %33 : memref<1x!tpu.dma_semaphore, #tpu.memory_space<semaphore_mem>> -> memref<!tpu.dma_semaphore, #tpu.memory_space<semaphore_mem>>
      tpu.enqueue_dma source(%30 : memref<8x512xf32, #tpu.memory_space<any>>) target(%32 : memref<8x512xf32, #tpu.memory_space<vmem>>) target_semaphore(%34 : memref<!tpu.dma_semaphore, #tpu.memory_space<semaphore_mem>>)
    } else {
    }
    %c0_i32_6 = arith.constant 0 : i32
    %17 = arith.cmpi eq, %arg2, %c0_i32_6 : i32
    %18 = arith.extui %17 : i1 to i32
    %c0_i32_7 = arith.constant 0 : i32
    %19 = arith.cmpi ne, %18, %c0_i32_7 : i32
    scf.if %19 {
      %c0_i32_16 = arith.constant 0 : i32
      %29 = tpu.memref_slice %arg3[%arg0, %c0_i32_16, %11] : memref<2x8x522xf32, #tpu.memory_space<any>> -> memref<1x8x512xf32, #tpu.memory_space<any>>
      %30 = tpu.memref_squeeze %29 : memref<1x8x512xf32, #tpu.memory_space<any>> -> memref<8x512xf32, #tpu.memory_space<any>>
      %c0_i32_17 = arith.constant 0 : i32
      %c0_i32_18 = arith.constant 0 : i32
      %31 = tpu.memref_slice %arg7[%9, %c0_i32_17, %c0_i32_18] : memref<2x8x512xf32, #tpu.memory_space<vmem>> -> memref<1x8x512xf32, #tpu.memory_space<vmem>>
      %32 = tpu.memref_squeeze %31 : memref<1x8x512xf32, #tpu.memory_space<vmem>> -> memref<8x512xf32, #tpu.memory_space<vmem>>
      %33 = tpu.memref_slice %arg9[%9] : memref<2x!tpu.dma_semaphore, #tpu.memory_space<semaphore_mem>> -> memref<1x!tpu.dma_semaphore, #tpu.memory_space<semaphore_mem>>
      %34 = tpu.memref_squeeze %33 : memref<1x!tpu.dma_semaphore, #tpu.memory_space<semaphore_mem>> -> memref<!tpu.dma_semaphore, #tpu.memory_space<semaphore_mem>>
      tpu.wait_dma2 semaphore(%34 : memref<!tpu.dma_semaphore, #tpu.memory_space<semaphore_mem>>) src(%30 : memref<8x512xf32, #tpu.memory_space<any>>) dst(%32 : memref<8x512xf32, #tpu.memory_space<vmem>>)
      %c1_i32_19 = arith.constant 1 : i32
      %35 = arith.addi %arg1, %c1_i32_19 : i32
      %c1_i32_20 = arith.constant 1 : i32
      %36 = arith.cmpi slt, %35, %c1_i32_20 : i32
      %37 = arith.extui %36 : i1 to i32
      %c0_i32_21 = arith.constant 0 : i32
      %38 = arith.cmpi ne, %37, %c0_i32_21 : i32
      scf.if %38 {
        %c384_i32_42 = arith.constant 384 : i32
        %75 = arith.addi %11, %c384_i32_42 : i32
        %c1_i32_43 = arith.constant 1 : i32
        %76 = arith.subi %c1_i32_43, %9 : i32
        %c0_i32_44 = arith.constant 0 : i32
        %77 = tpu.memref_slice %arg3[%arg0, %c0_i32_44, %75] : memref<2x8x522xf32, #tpu.memory_space<any>> -> memref<1x8x512xf32, #tpu.memory_space<any>>
        %78 = tpu.memref_squeeze %77 : memref<1x8x512xf32, #tpu.memory_space<any>> -> memref<8x512xf32, #tpu.memory_space<any>>
        %c0_i32_45 = arith.constant 0 : i32
        %c0_i32_46 = arith.constant 0 : i32
        %79 = tpu.memref_slice %arg7[%76, %c0_i32_45, %c0_i32_46] : memref<2x8x512xf32, #tpu.memory_space<vmem>> -> memref<1x8x512xf32, #tpu.memory_space<vmem>>
        %80 = tpu.memref_squeeze %79 : memref<1x8x512xf32, #tpu.memory_space<vmem>> -> memref<8x512xf32, #tpu.memory_space<vmem>>
        %81 = tpu.memref_slice %arg9[%76] : memref<2x!tpu.dma_semaphore, #tpu.memory_space<semaphore_mem>> -> memref<1x!tpu.dma_semaphore, #tpu.memory_space<semaphore_mem>>
        %82 = tpu.memref_squeeze %81 : memref<1x!tpu.dma_semaphore, #tpu.memory_space<semaphore_mem>> -> memref<!tpu.dma_semaphore, #tpu.memory_space<semaphore_mem>>
        tpu.enqueue_dma source(%78 : memref<8x512xf32, #tpu.memory_space<any>>) target(%80 : memref<8x512xf32, #tpu.memory_space<vmem>>) target_semaphore(%82 : memref<!tpu.dma_semaphore, #tpu.memory_space<semaphore_mem>>)
      } else {
      }
      %39 = arith.index_cast %9 : i32 to index
      %c0_22 = arith.constant 0 : index
      %c0_23 = arith.constant 0 : index
      %40 = vector.load %arg7[%39, %c0_22, %c0_23] : memref<2x8x512xf32, #tpu.memory_space<vmem>>, vector<1x8x384xf32>
      %41 = vector.shape_cast %40 : vector<1x8x384xf32> to vector<8x384xf32>
      %c0_24 = arith.constant 0 : index
      %c0_25 = arith.constant 0 : index
      %42 = vector.load %arg8[%c0_24, %c0_25] : memref<72x384xf32, #tpu.memory_space<vmem>>, vector<8x384xf32>
      tpu.vector_store %arg8[%c0_24, %c0_25], %41 {strides = array<i32>} : memref<72x384xf32, #tpu.memory_space<vmem>>, vector<8x384xf32>,
      %43 = arith.index_cast %9 : i32 to index
      %c0_26 = arith.constant 0 : index
      %c1 = arith.constant 1 : index
      %44 = vector.load %arg7[%43, %c0_26, %c1] : memref<2x8x512xf32, #tpu.memory_space<vmem>>, vector<1x8x384xf32>
      %45 = vector.shape_cast %44 : vector<1x8x384xf32> to vector<8x384xf32>
      %c8 = arith.constant 8 : index
      %c0_27 = arith.constant 0 : index
      %46 = vector.load %arg8[%c8, %c0_27] : memref<72x384xf32, #tpu.memory_space<vmem>>, vector<8x384xf32>
      tpu.vector_store %arg8[%c8, %c0_27], %45 {strides = array<i32>} : memref<72x384xf32, #tpu.memory_space<vmem>>, vector<8x384xf32>,
      %47 = arith.index_cast %9 : i32 to index
      %c0_28 = arith.constant 0 : index
      %c2 = arith.constant 2 : index
      %48 = vector.load %arg7[%47, %c0_28, %c2] : memref<2x8x512xf32, #tpu.memory_space<vmem>>, vector<1x8x384xf32>
      %49 = vector.shape_cast %48 : vector<1x8x384xf32> to vector<8x384xf32>
      %c16 = arith.constant 16 : index
      %c0_29 = arith.constant 0 : index
      %50 = vector.load %arg8[%c16, %c0_29] : memref<72x384xf32, #tpu.memory_space<vmem>>, vector<8x384xf32>
      tpu.vector_store %arg8[%c16, %c0_29], %49 {strides = array<i32>} : memref<72x384xf32, #tpu.memory_space<vmem>>, vector<8x384xf32>,
      %51 = arith.index_cast %9 : i32 to index
      %c0_30 = arith.constant 0 : index
      %c18 = arith.constant 18 : index
      %52 = vector.load %arg7[%51, %c0_30, %c18] : memref<2x8x512xf32, #tpu.memory_space<vmem>>, vector<1x8x384xf32>
      %53 = vector.shape_cast %52 : vector<1x8x384xf32> to vector<8x384xf32>
      %c24 = arith.constant 24 : index
      %c0_31 = arith.constant 0 : index
      %54 = vector.load %arg8[%c24, %c0_31] : memref<72x384xf32, #tpu.memory_space<vmem>>, vector<8x384xf32>
      tpu.vector_store %arg8[%c24, %c0_31], %53 {strides = array<i32>} : memref<72x384xf32, #tpu.memory_space<vmem>>, vector<8x384xf32>,
      %55 = arith.index_cast %9 : i32 to index
      %c0_32 = arith.constant 0 : index
      %c19 = arith.constant 19 : index
      %56 = vector.load %arg7[%55, %c0_32, %c19] : memref<2x8x512xf32, #tpu.memory_space<vmem>>, vector<1x8x384xf32>
      %57 = vector.shape_cast %56 : vector<1x8x384xf32> to vector<8x384xf32>
      %c32 = arith.constant 32 : index
      %c0_33 = arith.constant 0 : index
      %58 = vector.load %arg8[%c32, %c0_33] : memref<72x384xf32, #tpu.memory_space<vmem>>, vector<8x384xf32>
      tpu.vector_store %arg8[%c32, %c0_33], %57 {strides = array<i32>} : memref<72x384xf32, #tpu.memory_space<vmem>>, vector<8x384xf32>,
      %59 = arith.index_cast %9 : i32 to index
      %c0_34 = arith.constant 0 : index
      %c20 = arith.constant 20 : index
      %60 = vector.load %arg7[%59, %c0_34, %c20] : memref<2x8x512xf32, #tpu.memory_space<vmem>>, vector<1x8x384xf32>
      %61 = vector.shape_cast %60 : vector<1x8x384xf32> to vector<8x384xf32>
      %c40 = arith.constant 40 : index
      %c0_35 = arith.constant 0 : index
      %62 = vector.load %arg8[%c40, %c0_35] : memref<72x384xf32, #tpu.memory_space<vmem>>, vector<8x384xf32>
      tpu.vector_store %arg8[%c40, %c0_35], %61 {strides = array<i32>} : memref<72x384xf32, #tpu.memory_space<vmem>>, vector<8x384xf32>,
      %63 = arith.index_cast %9 : i32 to index
      %c0_36 = arith.constant 0 : index
      %c36 = arith.constant 36 : index
      %64 = vector.load %arg7[%63, %c0_36, %c36] : memref<2x8x512xf32, #tpu.memory_space<vmem>>, vector<1x8x384xf32>
      %65 = vector.shape_cast %64 : vector<1x8x384xf32> to vector<8x384xf32>
      %c48 = arith.constant 48 : index
      %c0_37 = arith.constant 0 : index
      %66 = vector.load %arg8[%c48, %c0_37] : memref<72x384xf32, #tpu.memory_space<vmem>>, vector<8x384xf32>
      tpu.vector_store %arg8[%c48, %c0_37], %65 {strides = array<i32>} : memref<72x384xf32, #tpu.memory_space<vmem>>, vector<8x384xf32>,
      %67 = arith.index_cast %9 : i32 to index
      %c0_38 = arith.constant 0 : index
      %c37 = arith.constant 37 : index
      %68 = vector.load %arg7[%67, %c0_38, %c37] : memref<2x8x512xf32, #tpu.memory_space<vmem>>, vector<1x8x384xf32>
      %69 = vector.shape_cast %68 : vector<1x8x384xf32> to vector<8x384xf32>
      %c56 = arith.constant 56 : index
      %c0_39 = arith.constant 0 : index
      %70 = vector.load %arg8[%c56, %c0_39] : memref<72x384xf32, #tpu.memory_space<vmem>>, vector<8x384xf32>
      tpu.vector_store %arg8[%c56, %c0_39], %69 {strides = array<i32>} : memref<72x384xf32, #tpu.memory_space<vmem>>, vector<8x384xf32>,
      %71 = arith.index_cast %9 : i32 to index
      %c0_40 = arith.constant 0 : index
      %c38 = arith.constant 38 : index
      %72 = vector.load %arg7[%71, %c0_40, %c38] : memref<2x8x512xf32, #tpu.memory_space<vmem>>, vector<1x8x384xf32>
      %73 = vector.shape_cast %72 : vector<1x8x384xf32> to vector<8x384xf32>
      %c64 = arith.constant 64 : index
      %c0_41 = arith.constant 0 : index
      %74 = vector.load %arg8[%c64, %c0_41] : memref<72x384xf32, #tpu.memory_space<vmem>>, vector<8x384xf32>
      tpu.vector_store %arg8[%c64, %c0_41], %73 {strides = array<i32>} : memref<72x384xf32, #tpu.memory_space<vmem>>, vector<8x384xf32>,
    } else {
    }
    %c0 = arith.constant 0 : index
    %c0_8 = arith.constant 0 : index
    %20 = vector.load %arg4[%c0, %c0_8] : memref<8x72xf32, #tpu.memory_space<vmem>>, vector<8x72xf32>
    %c0_9 = arith.constant 0 : index
    %c0_10 = arith.constant 0 : index
    %21 = vector.load %arg8[%c0_9, %c0_10] : memref<72x384xf32, #tpu.memory_space<vmem>>, vector<72x384xf32>
    %cst = arith.constant dense<0.000000e+00> : vector<8x384xf32>
    %22 = tpu.matmul %20, %21, %cst {dimension_numbers = #tpu.dot_dimension_numbers<[1], [0], [0], [1], [0, 0, 1, 1], [], []>} : vector<8x72xf32>, vector<72x384xf32>, vector<8x384xf32> -> vector<8x384xf32>
    %c0_11 = arith.constant 0 : index
    %c0_12 = arith.constant 0 : index
    %23 = vector.load %arg5[%c0_11, %c0_12] : memref<8x1xf32, #tpu.memory_space<vmem>>, vector<8x1xf32>
    %24 = vector.broadcast %23 : vector<8x1xf32> to vector<8x384xf32>
    %25 = arith.addf %22, %24 : vector<8x384xf32>
    %c0_13 = arith.constant 0 : index
    %c0_14 = arith.constant 0 : index
    %c0_15 = arith.constant 0 : index
    %26 = vector.load %arg6[%c0_13, %c0_14, %c0_15] : memref<1x8x384xf32, #tpu.memory_space<vmem>>, vector<1x8x384xf32>
    %27 = vector.shape_cast %26 : vector<1x8x384xf32> to vector<8x384xf32>
    %28 = vector.shape_cast %25 : vector<8x384xf32> to vector<1x8x384xf32>
    tpu.vector_store %arg6[%c0_13, %c0_14, %c0_15], %28 {strides = array<i32>} : memref<1x8x384xf32, #tpu.memory_space<vmem>>, vector<1x8x384xf32>,
    return
  }
  func.func @transform_1(%arg0: i32, %arg1: i32, %arg2: i32) -> (i32, i32) {
    %c0_i32 = arith.constant 0 : i32
    %c0_i32_0 = arith.constant 0 : i32
    return %arg2, %c0_i32 : i32, i32
  }
  func.func @transform_2(%arg0: i32, %arg1: i32, %arg2: i32) -> (i32, i32) {
    %c0_i32 = arith.constant 0 : i32
    %c0_i32_0 = arith.constant 0 : i32
    return %arg2, %c0_i32 : i32, i32
  }
  func.func @transform_3(%arg0: i32, %arg1: i32, %arg2: i32) -> (i32, i32, i32) {
    %c0_i32 = arith.constant 0 : i32
    return %arg0, %arg2, %arg1 : i32, i32, i32
  }
}

</mosaic_0001>

<llo_original>
// kernel: tpu_custom_call.1
$region0: #{tpu_custom_call.1}
  #allocation0 [shape = 'u32[]', space=smem, size = 0x4, offset = 0x4, fixed_abs, tag = 'smem constant byte address 0x4 - core index']
  #allocation1 [shape = 'u32[144,128]{1,0:T(1,128)}', space=vmem, size = 0x12000, scoped, tag = 'internal scratch']
  #allocation2 [shape = 'f32[2,8,512]{2,1,0:T(8,128)}', space=vmem, size = 0x8000, scoped, tag = 'scratch operand']
  #allocation3 [shape = 'f32[72,384]{1,0:T(8,128)}', space=vmem, size = 0x1b000, scoped, tag = 'scratch operand']
  #allocation4 [shape = 's32[2]{0}', space=sflag, size = 0x8, scoped, tag = 'scratch operand']
  #allocation7 [shape = 's32[]', space=sflag, size = 0x4, offset = 0, fixed_abs, tag = 'sflag constant byte address 0x0 - dummy sync flag']
  #allocation8 [shape = 's32[]', space=sflag, size = 0x4, offset = 0, fixed_abs, tag = 'sflag constant byte address 0x0 - dummy sync flag']
  #allocation9 [shape = 'u32[]', space=smem, size = 0x4, offset = 0x44, fixed_abs, tag = 'smem constant byte address 0x44 - assertion arg 0']
  #allocation10 [shape = 'u32[]', space=smem, size = 0x4, offset = 0x48, fixed_abs, tag = 'smem constant byte address 0x48 - assertion arg 1']
  #allocation11 [shape = 's32[]', space=sflag, size = 0x4, offset = 0, fixed_abs, tag = 'sflag constant byte address 0x0 - dummy sync flag']
  #allocation12 [shape = 's32[]', space=sflag, size = 0x4, offset = 0, fixed_abs, tag = 'sflag constant byte address 0x0 - dummy sync flag']
  %s0 = inlined_call_operand.hbm [shape: f32[2,8,522], index: 0, kind: input, shape index: {}]
  %s1 = inlined_call_operand.vmem [shape: f32[8,72], index: 1, kind: input, shape index: {}]
  %s2 = inlined_call_operand.vmem [shape: f32[8,1], index: 2, kind: input, shape index: {}]
  %s3 = inlined_call_operand.hbm [shape: f32[2,8,384], index: 3, kind: output, shape index: {}]
  %s4 = sld [smem:[#allocation0]]
  $region61: #{tpu_custom_call.1} parent=0
    _
  %s6 = ssub.s32 1, %s4
  %s7 = scalar_select 0, %s6, %s4
  $region1: #{tpu_custom_call.1} parent=0
    #allocation5 [shape = 'u8[24576]{0}', space=vmem, size = 0x6000, scoped, tag = 'output window, operand 0']
    #allocation6 [shape = 's32[2]{0}', space=sflag, size = 0x8, scoped, tag = 'scoped memory for tpu_custom_call.1']
    %8 = vsyncpa [#allocation6], 0
    %s9 = scalar_lea.sflag [#allocation6], 1
    %10 = vsyncpa %s9, 0
    loop: start=0, step=1, limit=4
    $region2: #{tpu_custom_call.1} parent=1 // loop_pre_header
      _
    $region3: #{tpu_custom_call.1} parent=1 // loop_header
      %s12 = sphi 0, %s16
      %p13 = scmp.ge.s32.totalorder %s12, 4
      %s19 = sphi 0, %s38
      %s20 = sphi 0, %s34
      %s21 = sphi 0, %s30
      %s22 = sphi 0, %s19
      %s23 = sphi 0, %s20
      %s24 = sphi 0, %s21
      %s25 = sphi 0, %s22
      %s26 = sphi 0, %s23
      %s27 = sphi 0, %s24
      %s41 = sphi 0, %s43
      %s44 = sphi 0, %s41
      %s45 = sphi 0, %s44
      %s61 = sphi 0, %s45
      %s67 = sphi 0, %s69
      %s70 = sphi 0, %s67
      %s71 = sphi 0, %s70
      %s87 = sphi 0, %s71
      %s97 = sphi 0, %s99
      %s100 = sphi 0, %s97
      %s101 = sphi 0, %s100
      %s117 = sphi 0, %s101
    $region4: #{tpu_custom_call.1} parent=1 // loop_header_branch
      %15 = sbr.rel (%p13) target = $region8
    $region5: #{tpu_custom_call.1} parent=1 // loop_body
      %s17 = ssub.s32 %s12, 1
      %s18 = ssub.s32 %s12, 2
      %s28 = sadd.s32 1, %s21
      %p29 = scmp.ge.s32.totalorder %s28, 1
      %s30 = scalar_select %p29, 0, %s28
      %s31 = sadd.s32 1, %s20
      %s32 = scalar_select %p29, %s31, %s20
      %p33 = scmp.ge.s32.totalorder %s32, 1
      %s34 = scalar_select %p33, 0, %s32
      %s35 = sadd.s32 1, %s19
      %s36 = scalar_select %p33, %s35, %s19
      %p37 = scmp.ge.s32.totalorder %s36, 2
      %s38 = scalar_select %p37, 0, %s36
      %s39 = ssub.s32 %s21, %s30
      %p40 = scmp.eq.s32.totalorder %s39, 0
      %s42 = sadd.s32 %s41, 1
      %s43 = scalar_select %p40, %s41, %s42
      %p46 = pneg %p40
      %p47 = scmp.eq.s32.totalorder %s12, 1
      %p48 = por %p46, %p47
      %p49 = scmp.ne.s32.totalorder %s41, %s44
      %p50 = scmp.eq.s32.totalorder %s12, 0
      %p51 = por %p49, %p50
      %p52 = scmp.ne.s32.totalorder %s41, %s44
      %p53 = scmp.eq.s32.totalorder %s17, 1
      %p54 = por %p52, %p53
      %p55 = scmp.ne.s32.totalorder %s44, %s45
      %p56 = scmp.eq.s32.totalorder %s17, 0
      %p57 = por %p55, %p56
      %p58 = scmp.ne.s32.totalorder %s44, %s45
      %p59 = scmp.eq.s32.totalorder %s18, 1
      %p60 = por %p58, %p59
      %p62 = scmp.ne.s32.totalorder %s45, %s61
      %p63 = scmp.eq.s32.totalorder %s18, 0
      %p64 = por %p62, %p63
      %s65 = ssub.s32 %s21, %s30
      %p66 = scmp.eq.s32.totalorder %s65, 0
      %s68 = sadd.s32 %s67, 1
      %s69 = scalar_select %p66, %s67, %s68
      %p72 = pneg %p66
      %p73 = scmp.eq.s32.totalorder %s12, 1
      %p74 = por %p72, %p73
      %p75 = scmp.ne.s32.totalorder %s67, %s70
      %p76 = scmp.eq.s32.totalorder %s12, 0
      %p77 = por %p75, %p76
      %p78 = scmp.ne.s32.totalorder %s67, %s70
      %p79 = scmp.eq.s32.totalorder %s17, 1
      %p80 = por %p78, %p79
      %p81 = scmp.ne.s32.totalorder %s70, %s71
      %p82 = scmp.eq.s32.totalorder %s17, 0
      %p83 = por %p81, %p82
      %p84 = scmp.ne.s32.totalorder %s70, %s71
      %p85 = scmp.eq.s32.totalorder %s18, 1
      %p86 = por %p84, %p85
      %p88 = scmp.ne.s32.totalorder %s71, %s87
      %p89 = scmp.eq.s32.totalorder %s18, 0
      %p90 = por %p88, %p89
      %s91 = ssub.s32 %s19, %s38
      %s92 = ssub.s32 %s21, %s30
      %s93 = sor.u32 %s91, %s92
      %s94 = ssub.s32 %s20, %s34
      %s95 = sor.u32 %s93, %s94
      %p96 = scmp.eq.s32.totalorder %s95, 0
      %s98 = sadd.s32 %s97, 1
      %s99 = scalar_select %p96, %s97, %s98
      %p102 = pneg %p96
      %p103 = scmp.eq.s32.totalorder %s12, 1
      %p104 = por %p102, %p103
      %p105 = scmp.ne.s32.totalorder %s97, %s100
      %p106 = scmp.eq.s32.totalorder %s12, 0
      %p107 = por %p105, %p106
      %p108 = scmp.ne.s32.totalorder %s97, %s100
      %p109 = scmp.eq.s32.totalorder %s17, 1
      %p110 = por %p108, %p109
      %p111 = scmp.ne.s32.totalorder %s100, %s101
      %p112 = scmp.eq.s32.totalorder %s17, 0
      %p113 = por %p111, %p112
      %p114 = scmp.ne.s32.totalorder %s100, %s101
      %p115 = scmp.eq.s32.totalorder %s18, 1
      %p116 = por %p114, %p115
      %p118 = scmp.ne.s32.totalorder %s101, %s117
      %p119 = scmp.eq.s32.totalorder %s18, 0
      %p120 = por %p118, %p119
      %p121 = scmp.le.s32.totalorder 1, %s12
      %p122 = scmp.lt.s32.totalorder %s12, 3
      %p123 = pnand %p121, %p122
      %p124 = pneg %p123
      // Predicated region
      $region9: #{tpu_custom_call.1} parent=5 // pred_check
        _
      $region10: #{tpu_custom_call.1} parent=5 // pred_check_branch
        %126 = sbr.rel (%p123) target = $region12
      $region11: #{tpu_custom_call.1} parent=5 // pred_region
        %s127 = ssub.s32 %s12, 1
        // Predicated region
        $region13: #{tpu_custom_call.1} parent=11 // pred_check
          %p128 = pneg %p57
        $region14: #{tpu_custom_call.1} parent=11 // pred_check_branch
          %130 = sbr.rel (%p128) target = $region16
        $region15: #{tpu_custom_call.1} parent=11 // pred_region
          %p131 = scmp.lt.s32.totalorder %s24, 0
          %s132 = scalar_select %p131, %s24, 0
          %s133 = smul.addr %s132, 8
          %s134 = scalar_lea.vmem %s1, %s133
        $region16: #{tpu_custom_call.1} parent=11 // pred_fallthru
          _
        // Predicated region
        $region17: #{tpu_custom_call.1} parent=11 // pred_check
          %p135 = pneg %p83
        $region18: #{tpu_custom_call.1} parent=11 // pred_check_branch
          %137 = sbr.rel (%p135) target = $region20
        $region19: #{tpu_custom_call.1} parent=11 // pred_region
          %p138 = scmp.lt.s32.totalorder %s24, 0
          %s139 = scalar_select %p138, %s24, 0
          %s140 = smul.addr %s139, 8
          %s141 = scalar_lea.vmem %s2, %s140
        $region20: #{tpu_custom_call.1} parent=11 // pred_fallthru
          _
      $region12: #{tpu_custom_call.1} parent=5 // pred_fallthru
        _
      %p142 = scmp.lt.s32.totalorder %s12, 2
      // Predicated region
      $region21: #{tpu_custom_call.1} parent=5 // pred_check
        %p143 = pneg %p142
      $region22: #{tpu_custom_call.1} parent=5 // pred_check_branch
        %145 = sbr.rel (%p143) target = $region24
      $region23: #{tpu_custom_call.1} parent=5 // pred_region
        _
      $region24: #{tpu_custom_call.1} parent=5 // pred_fallthru
        _
      %p146 = scmp.le.s32.totalorder 1, %s12
      %p147 = scmp.lt.s32.totalorder %s12, 3
      %p148 = pnand %p146, %p147
      %p149 = pneg %p148
      // Predicated region
      $region25: #{tpu_custom_call.1} parent=5 // pred_check
        _
      $region26: #{tpu_custom_call.1} parent=5 // pred_check_branch
        %151 = sbr.rel (%p148) target = $region28
      $region27: #{tpu_custom_call.1} parent=5 // pred_region
        %s152 = ssub.s32 %s12, 1
        %p153 = scmp.lt.s32.totalorder %s24, 0
        %s154 = scalar_select %p153, %s24, 0
        %s155 = smul.addr %s154, 8
        %s156 = scalar_lea.vmem %s1, %s155
        %p157 = pneg %p57
        %p158 = pneg %p54
        %p159 = scmp.lt.s32.totalorder %s24, 0
        %s160 = scalar_select %p159, %s24, 0
        %s161 = smul.addr %s160, 8
        %s162 = scalar_lea.vmem %s2, %s161
        %p163 = pneg %p83
        %p164 = pneg %p80
        %p165 = pneg %p113
        %p166 = pneg %p110
        %s167 = sand.u32 %s100, 1
        %s168 = scalar_lea.sflag [#allocation6], %s167
        %s169 = sand.u32 %s100, 1
        %s170 = smul.addr %s169, 24
        %s171 = scalar_lea.vmem [#allocation5], %s170
        %p172 = scmp.lt.s32.totalorder %s24, 0
        %s173 = scalar_select %p172, %s24, 0
        %s174 = smul.addr %s173, 8
        %s175 = scalar_lea.vmem %s1, %s174
        %p176 = scmp.lt.s32.totalorder %s24, 0
        %s177 = scalar_select %p176, %s24, 0
        %s178 = smul.addr %s177, 8
        %s179 = scalar_lea.vmem %s2, %s178
        %s180 = smul.u32 3, %s23
        %p181 = scmp.lt.s32.totalorder %s23, 0
        %s182 = ssub.s32 0, %s23
        %s183 = scalar_select %p181, %s182, %s23
        %s184 = sand.u32 %s183, 1
        %s185 = ssub.s32 0, %s184
        %s186 = scalar_select %p181, %s185, %s184
        %p187 = scmp.ne.s32.totalorder %s186, 0
        %p188 = scmp.lt.s32.totalorder %s186, 0
        %p189 = pnand %p188, %p187
        %p190 = pneg %p189
        %s191 = sadd.s32 %s186, 2
        %s192 = scalar_select %p190, %s191, %s186
        %s193 = smul.u32 %s23, 384
        %p194 = scmp.eq.s32.totalorder %s23, 0
        %p195 = scmp.eq.s32.totalorder %s24, 0
        %p196 = pnand %p194, %p195
        %p197 = pneg %p196
        // Predicated region
        $region29: #{tpu_custom_call.1} parent=27 // pred_check
          _
        $region30: #{tpu_custom_call.1} parent=27 // pred_check_branch
          %199 = sbr.rel (%p196) target = $region32
        $region31: #{tpu_custom_call.1} parent=27 // pred_region
          %s200 = sshra.s32 %s193, 7
          %s201 = sand.u32 %s193, 127
          %s202 = smul.u32 %s22, 5
          %s203 = sadd.s32 %s200, %s202
          %s204 = smul.addr %s203, 128
          %s205 = scalar_lea.hbm %s0, %s204
          %s206 = smul.u32 %s192, 4
          %s207 = smul.addr %s206, 8
          %s208 = scalar_lea.vmem [#allocation2], %s207
          %s209 = scalar_lea.sflag [#allocation4], %s192
          // Predicated region
          $region33: #{tpu_custom_call.1} parent=31 // pred_check
            _
          $region34: #{tpu_custom_call.1} parent=31 // pred_check_branch
            %211 = sbr.rel target = $region36
          $region35: #{tpu_custom_call.1} parent=31 // pred_region
            %212 = sst [smem:[#allocation9]] [#allocation8]
            %213 = sst [smem:[#allocation10]] [#allocation7]
          $region36: #{tpu_custom_call.1} parent=31 // pred_fallthru
            _
          %215 = shalt.err (0)
          %s217 = sshll.u32 %s208, 4
          %s218 = int_to_ptr.vmem [resolvable:$true] %s217
          %220 = dma.hbm_to_vmem [thread:$0]  %s205, 512, %s218, %s209
        $region32: #{tpu_custom_call.1} parent=27 // pred_fallthru
          _
        // Predicated region
        $region37: #{tpu_custom_call.1} parent=27 // pred_check
          %p221 = pneg %p195
        $region38: #{tpu_custom_call.1} parent=27 // pred_check_branch
          %223 = sbr.rel (%p221) target = $region40
        $region39: #{tpu_custom_call.1} parent=27 // pred_region
          %s224 = smul.u32 %s192, 4
          %s225 = smul.addr %s224, 8
          %s226 = scalar_lea.vmem [#allocation2], %s225
          %s227 = scalar_lea.sflag [#allocation4], %s192
          %s228 = smul.u32 8, 1
          %s229 = smul.u32 %s228, 4
          %s230 = sshll.u32 %s229, 4
          %231 = dma.done %s227, %s230
          %s232 = sadd.s32 %s23, 1
          %p233 = scmp.lt.s32.totalorder %s232, 1
          // Predicated region
          $region41: #{tpu_custom_call.1} parent=39 // pred_check
            %p234 = pneg %p233
          $region42: #{tpu_custom_call.1} parent=39 // pred_check_branch
            %236 = sbr.rel (%p234) target = $region44
          $region43: #{tpu_custom_call.1} parent=39 // pred_region
            %s237 = sadd.s32 %s193, 384
            %s238 = ssub.s32 1, %s192
            %s239 = sshra.s32 %s237, 7
            %s240 = sand.u32 %s237, 127
            %s241 = smul.u32 %s22, 5
            %s242 = sadd.s32 %s239, %s241
            %s243 = smul.addr %s242, 128
            %s244 = scalar_lea.hbm %s0, %s243
            %s245 = smul.u32 %s238, 4
            %s246 = smul.addr %s245, 8
            %s247 = scalar_lea.vmem [#allocation2], %s246
            %s248 = scalar_lea.sflag [#allocation4], %s238
            // Predicated region
            $region45: #{tpu_custom_call.1} parent=43 // pred_check
              _
            $region46: #{tpu_custom_call.1} parent=43 // pred_check_branch
              %250 = sbr.rel target = $region48
            $region47: #{tpu_custom_call.1} parent=43 // pred_region
              %251 = sst [smem:[#allocation9]] [#allocation12]
              %252 = sst [smem:[#allocation10]] [#allocation11]
            $region48: #{tpu_custom_call.1} parent=43 // pred_fallthru
              _
            %254 = shalt.err (0)
            %s256 = sshll.u32 %s247, 4
            %s257 = int_to_ptr.vmem [resolvable:$true] %s256
            %259 = dma.hbm_to_vmem [thread:$0]  %s244, 512, %s257, %s248
          $region44: #{tpu_custom_call.1} parent=39 // pred_fallthru
            _
          %v260 = vld [vmem:[%s226] sm:$0xff]
          %v261 = vld [vmem:[%s226 + $0x8] sm:$0xff]
          %v262 = vld [vmem:[%s226 + $0x10] sm:$0xff]
          %263 = vst [vmem:[#allocation3] sm:$0xff] %v260
          %264 = vst [vmem:[#allocation3 + $0x8] sm:$0xff] %v261
          %265 = vst [vmem:[#allocation3 + $0x10] sm:$0xff] %v262
          %v266 = vld [vmem:[%s226] sm:$0xff]
          %v267 = vld [vmem:[%s226 + $0x8] sm:$0xff]
          %v268 = vld [vmem:[%s226 + $0x10] sm:$0xff]
          %v269 = vld [vmem:[%s226 + $0x18] sm:$0xff]
          %274 = vrot.lane.b32.xlu0 %v266, 127
          %v275 = vpop.permute.xlu0 %274
          %276 = vrot.lane.b32.xlu0 %v267, 127
          %v277 = vpop.permute.xlu0 %276
          %278 = vrot.lane.b32.xlu0 %v268, 127
          %v279 = vpop.permute.xlu0 %278
          %280 = vrot.lane.b32.xlu0 %v269, 127
          %v281 = vpop.permute.xlu0 %280
          %vm282 = vcmask 1039360
          %v283 = vsel %vm282, %v275, %v277
          %v284 = vsel %vm282, %v277, %v279
          %v285 = vsel %vm282, %v279, %v281
          %289 = vst [vmem:[#allocation3 + $0x18] sm:$0xff] %v283
          %290 = vst [vmem:[#allocation3 + $0x20] sm:$0xff] %v284
          %291 = vst [vmem:[#allocation3 + $0x28] sm:$0xff] %v285
          %v292 = vld [vmem:[%s226] sm:$0xff]
          %v293 = vld [vmem:[%s226 + $0x8] sm:$0xff]
          %v294 = vld [vmem:[%s226 + $0x10] sm:$0xff]
          %v295 = vld [vmem:[%s226 + $0x18] sm:$0xff]
          %300 = vrot.lane.b32.xlu0 %v292, 126
          %v301 = vpop.permute.xlu0 %300
          %302 = vrot.lane.b32.xlu0 %v293, 126
          %v303 = vpop.permute.xlu0 %302
          %304 = vrot.lane.b32.xlu0 %v294, 126
          %v305 = vpop.permute.xlu0 %304
          %306 = vrot.lane.b32.xlu0 %v295, 126
          %v307 = vpop.permute.xlu0 %306
          %vm308 = vcmask 1031168
          %v309 = vsel %vm308, %v301, %v303
          %v310 = vsel %vm308, %v303, %v305
          %v311 = vsel %vm308, %v305, %v307
          %315 = vst [vmem:[#allocation3 + $0x30] sm:$0xff] %v309
          %316 = vst [vmem:[#allocation3 + $0x38] sm:$0xff] %v310
          %317 = vst [vmem:[#allocation3 + $0x40] sm:$0xff] %v311
          %v318 = vld [vmem:[%s226] sm:$0xff]
          %v319 = vld [vmem:[%s226 + $0x8] sm:$0xff]
          %v320 = vld [vmem:[%s226 + $0x10] sm:$0xff]
          %v321 = vld [vmem:[%s226 + $0x18] sm:$0xff]
          %326 = vrot.lane.b32.xlu0 %v318, 110
          %v327 = vpop.permute.xlu0 %326
          %328 = vrot.lane.b32.xlu0 %v319, 110
          %v329 = vpop.permute.xlu0 %328
          %330 = vrot.lane.b32.xlu0 %v320, 110
          %v331 = vpop.permute.xlu0 %330
          %332 = vrot.lane.b32.xlu0 %v321, 110
          %v333 = vpop.permute.xlu0 %332
          %vm334 = vcmask 900096
          %v335 = vsel %vm334, %v327, %v329
          %v336 = vsel %vm334, %v329, %v331
          %v337 = vsel %vm334, %v331, %v333
          %341 = vst [vmem:[#allocation3 + $0x48] sm:$0xff] %v335
          %342 = vst [vmem:[#allocation3 + $0x50] sm:$0xff] %v336
          %343 = vst [vmem:[#allocation3 + $0x58] sm:$0xff] %v337
          %v344 = vld [vmem:[%s226] sm:$0xff]
          %v345 = vld [vmem:[%s226 + $0x8] sm:$0xff]
          %v346 = vld [vmem:[%s226 + $0x10] sm:$0xff]
          %v347 = vld [vmem:[%s226 + $0x18] sm:$0xff]
          %352 = vrot.lane.b32.xlu0 %v344, 109
          %v353 = vpop.permute.xlu0 %352
          %354 = vrot.lane.b32.xlu0 %v345, 109
          %v355 = vpop.permute.xlu0 %354
          %356 = vrot.lane.b32.xlu0 %v346, 109
          %v357 = vpop.permute.xlu0 %356
          %358 = vrot.lane.b32.xlu0 %v347, 109
          %v359 = vpop.permute.xlu0 %358
          %vm360 = vcmask 891904
          %v361 = vsel %vm360, %v353, %v355
          %v362 = vsel %vm360, %v355, %v357
          %v363 = vsel %vm360, %v357, %v359
          %367 = vst [vmem:[#allocation3 + $0x60] sm:$0xff] %v361
          %368 = vst [vmem:[#allocation3 + $0x68] sm:$0xff] %v362
          %369 = vst [vmem:[#allocation3 + $0x70] sm:$0xff] %v363
          %v370 = vld [vmem:[%s226] sm:$0xff]
          %v371 = vld [vmem:[%s226 + $0x8] sm:$0xff]
          %v372 = vld [vmem:[%s226 + $0x10] sm:$0xff]
          %v373 = vld [vmem:[%s226 + $0x18] sm:$0xff]
          %378 = vrot.lane.b32.xlu0 %v370, 108
          %v379 = vpop.permute.xlu0 %378
          %380 = vrot.lane.b32.xlu0 %v371, 108
          %v381 = vpop.permute.xlu0 %380
          %382 = vrot.lane.b32.xlu0 %v372, 108
          %v383 = vpop.permute.xlu0 %382
          %384 = vrot.lane.b32.xlu0 %v373, 108
          %v385 = vpop.permute.xlu0 %384
          %vm386 = vcmask 883712
          %v387 = vsel %vm386, %v379, %v381
          %v388 = vsel %vm386, %v381, %v383
          %v389 = vsel %vm386, %v383, %v385
          %393 = vst [vmem:[#allocation3 + $0x78] sm:$0xff] %v387
          %394 = vst [vmem:[#allocation3 + $0x80] sm:$0xff] %v388
          %395 = vst [vmem:[#allocation3 + $0x88] sm:$0xff] %v389
          %v396 = vld [vmem:[%s226] sm:$0xff]
          %v397 = vld [vmem:[%s226 + $0x8] sm:$0xff]
          %v398 = vld [vmem:[%s226 + $0x10] sm:$0xff]
          %v399 = vld [vmem:[%s226 + $0x18] sm:$0xff]
          %404 = vrot.lane.b32.xlu0 %v396, 92
          %v405 = vpop.permute.xlu0 %404
          %406 = vrot.lane.b32.xlu0 %v397, 92
          %v407 = vpop.permute.xlu0 %406
          %408 = vrot.lane.b32.xlu0 %v398, 92
          %v409 = vpop.permute.xlu0 %408
          %410 = vrot.lane.b32.xlu0 %v399, 92
          %v411 = vpop.permute.xlu0 %410
          %vm412 = vcmask 752640
          %v413 = vsel %vm412, %v405, %v407
          %v414 = vsel %vm412, %v407, %v409
          %v415 = vsel %vm412, %v409, %v411
          %419 = vst [vmem:[#allocation3 + $0x90] sm:$0xff] %v413
          %420 = vst [vmem:[#allocation3 + $0x98] sm:$0xff] %v414
          %421 = vst [vmem:[#allocation3 + $0xa0] sm:$0xff] %v415
          %v422 = vld [vmem:[%s226] sm:$0xff]
          %v423 = vld [vmem:[%s226 + $0x8] sm:$0xff]
          %v424 = vld [vmem:[%s226 + $0x10] sm:$0xff]
          %v425 = vld [vmem:[%s226 + $0x18] sm:$0xff]
          %430 = vrot.lane.b32.xlu0 %v422, 91
          %v431 = vpop.permute.xlu0 %430
          %432 = vrot.lane.b32.xlu0 %v423, 91
          %v433 = vpop.permute.xlu0 %432
          %434 = vrot.lane.b32.xlu0 %v424, 91
          %v435 = vpop.permute.xlu0 %434
          %436 = vrot.lane.b32.xlu0 %v425, 91
          %v437 = vpop.permute.xlu0 %436
          %vm438 = vcmask 744448
          %v439 = vsel %vm438, %v431, %v433
          %v440 = vsel %vm438, %v433, %v435
          %v441 = vsel %vm438, %v435, %v437
          %445 = vst [vmem:[#allocation3 + $0xa8] sm:$0xff] %v439
          %446 = vst [vmem:[#allocation3 + $0xb0] sm:$0xff] %v440
          %447 = vst [vmem:[#allocation3 + $0xb8] sm:$0xff] %v441
          %v448 = vld [vmem:[%s226] sm:$0xff]
          %v449 = vld [vmem:[%s226 + $0x8] sm:$0xff]
          %v450 = vld [vmem:[%s226 + $0x10] sm:$0xff]
          %v451 = vld [vmem:[%s226 + $0x18] sm:$0xff]
          %456 = vrot.lane.b32.xlu0 %v448, 90
          %v457 = vpop.permute.xlu0 %456
          %458 = vrot.lane.b32.xlu0 %v449, 90
          %v459 = vpop.permute.xlu0 %458
          %460 = vrot.lane.b32.xlu0 %v450, 90
          %v461 = vpop.permute.xlu0 %460
          %462 = vrot.lane.b32.xlu0 %v451, 90
          %v463 = vpop.permute.xlu0 %462
          %vm464 = vcmask 736256
          %v465 = vsel %vm464, %v457, %v459
          %v466 = vsel %vm464, %v459, %v461
          %v467 = vsel %vm464, %v461, %v463
          %471 = vst [vmem:[#allocation3 + $0xc0] sm:$0xff] %v465
          %472 = vst [vmem:[#allocation3 + $0xc8] sm:$0xff] %v466
          %473 = vst [vmem:[#allocation3 + $0xd0] sm:$0xff] %v467
        $region40: #{tpu_custom_call.1} parent=27 // pred_fallthru
          _
        %v474 = vld [vmem:[%s175] sm:$0xff]
        %v475 = vld [vmem:[#allocation3] sm:$0xff]
        %v476 = vld [vmem:[#allocation3 + $0x8] sm:$0xff]
        %v477 = vld [vmem:[#allocation3 + $0x10] sm:$0xff]
        %v478 = vld [vmem:[#allocation3 + $0x18] sm:$0xff]
        %v479 = vld [vmem:[#allocation3 + $0x20] sm:$0xff]
        %v480 = vld [vmem:[#allocation3 + $0x28] sm:$0xff]
        %v481 = vld [vmem:[#allocation3 + $0x30] sm:$0xff]
        %v482 = vld [vmem:[#allocation3 + $0x38] sm:$0xff]
        %v483 = vld [vmem:[#allocation3 + $0x40] sm:$0xff]
        %v484 = vld [vmem:[#allocation3 + $0x48] sm:$0xff]
        %v485 = vld [vmem:[#allocation3 + $0x50] sm:$0xff]
        %v486 = vld [vmem:[#allocation3 + $0x58] sm:$0xff]
        %v487 = vld [vmem:[#allocation3 + $0x60] sm:$0xff]
        %v488 = vld [vmem:[#allocation3 + $0x68] sm:$0xff]
        %v489 = vld [vmem:[#allocation3 + $0x70] sm:$0xff]
        %v490 = vld [vmem:[#allocation3 + $0x78] sm:$0xff]
        %v491 = vld [vmem:[#allocation3 + $0x80] sm:$0xff]
        %v492 = vld [vmem:[#allocation3 + $0x88] sm:$0xff]
        %v493 = vld [vmem:[#allocation3 + $0x90] sm:$0xff]
        %v494 = vld [vmem:[#allocation3 + $0x98] sm:$0xff]
        %v495 = vld [vmem:[#allocation3 + $0xa0] sm:$0xff]
        %v496 = vld [vmem:[#allocation3 + $0xa8] sm:$0xff]
        %v497 = vld [vmem:[#allocation3 + $0xb0] sm:$0xff]
        %v498 = vld [vmem:[#allocation3 + $0xb8] sm:$0xff]
        %v499 = vld [vmem:[#allocation3 + $0xc0] sm:$0xff]
        %v500 = vld [vmem:[#allocation3 + $0xc8] sm:$0xff]
        %v501 = vld [vmem:[#allocation3 + $0xd0] sm:$0xff]
        %v502 = vld [vmem:[%s179] sm:$0xff]
        %504 = vset.pattern.permute.xlu0 0
        %505 = vperm.xlu0 %504, %v502
        %v506 = vpop.permute.xlu0 %505
        %vm508 = vcmask 588800
        %v510 = vsel %vm508, %v474, 0
        %512 = vmatprep.subr.mxu0 %v476
        %513 = vmatpush1.msra.mxu0 %v475
        %514 = vmatprep.subr.mxu0 %v479
        %515 = vmatpush1.msra.mxu0 %v478
        %516 = vmatprep.subr.mxu0 %v482
        %517 = vmatpush1.msra.mxu0 %v481
        %518 = vmatprep.subr.mxu0 %v485
        %519 = vmatpush1.msra.mxu0 %v484
        %520 = vmatprep.subr.mxu0 %v488
        %521 = vmatpush1.msra.mxu0 %v487
        %522 = vmatprep.subr.mxu0 %v491
        %523 = vmatpush1.msra.mxu0 %v490
        %524 = vmatprep.subr.mxu0 %v494
        %525 = vmatpush1.msra.mxu0 %v493
        %526 = vmatprep.subr.mxu0 %v497
        %527 = vmatpush1.msra.mxu0 %v496
        %528 = vmatprep.subr.mxu0 %v500
        %529 = vmatpush1.msra.mxu0 %v499
        %530 = vmatprep.subr.mxu0 0.0
        %531 = vmatpush1.msra.mxu0 0.0
        %532 = vmatprep.subr.mxu0 0.0
        %533 = vmatpush1.msra.mxu0 0.0
        %534 = vmatprep.subr.mxu0 0.0
        %535 = vmatpush1.msra.mxu0 0.0
        %536 = vmatprep.subr.mxu0 0.0
        %537 = vmatpush1.msra.mxu0 0.0
        %538 = vmatprep.subr.mxu0 0.0
        %539 = vmatpush1.msra.mxu0 0.0
        %540 = vmatprep.subr.mxu0 0.0
        %541 = vmatpush1.msra.mxu0 0.0
        %542 = vmatprep.subr.mxu0 0.0
        %543 = vmatpush1.msra.mxu0 0.0
        %544 = vmatprep.subr.mxu0 0.0
        %545 = vmatpush1.msra.mxu0 0.0
        %546 = vmatprep.subr.mxu0 0.0
        %547 = vmatpush1.msra.mxu0 0.0
        %548 = vmatprep.subr.mxu0 0.0
        %549 = vmatpush1.msra.mxu0 0.0
        %550 = vmatprep.subr.mxu0 0.0
        %551 = vmatpush1.msra.mxu0 0.0
        %552 = vmatprep.subr.mxu0 0.0
        %553 = vmatpush1.msra.mxu0 0.0
        %554 = vmatprep.subr.mxu0 0.0
        %555 = vmatpush1.msra.mxu0 0.0
        %556 = vmatprep.subr.mxu0 0.0
        %557 = vmatpush1.msra.mxu0 0.0
        %558 = vmatprep.subr.mxu0 0.0
        %559 = vmatpush1.msra.mxu0 0.0
        %560 = vmatprep.subr.mxu0 0.0
        %561 = vmatpush1.msra.mxu0 0.0
        %562 = vmatprep.subr.mxu0 0.0
        %563 = vmatpush1.msra.mxu0 0.0
        %564 = vmatprep.subr.mxu0 0.0
        %565 = vmatpush1.msra.mxu0 0.0
        %566 = vmatprep.subr.mxu0 0.0
        %567 = vmatpush1.msra.mxu0 0.0
        %568 = vmatprep.subr.mxu0 0.0
        %569 = vmatpush1.msra.mxu0 0.0
        %570 = vmatprep.subr.mxu0 0.0
        %571 = vmatpush1.msra.mxu0 0.0
        %572 = vmatprep.subr.mxu0 0.0
        %573 = vmatpush1.msra.mxu0 0.0
        %574 = vmatprep.subr.mxu0 0.0
        %575 = vmatpush1.msra.mxu0 0.0
        %576 = vmatprep.mubr.f32.mxu0 0.0
        %577 = vmatmul.mubr.f32.gmra.mrb[0].mxu0 %v510
        %v578 = vpop.f32.mrb[0].mxu0
        %v579 = vadd.f32 %v506, %v578
        %v580 = vpop.f32.mrb[0].mxu0
        %v581 = vadd.f32 %v506, %v580
        %582 = vdwg.mxu0
        %583 = vmatprep.subr.mxu0 0.0
        %584 = vmatpush1.msra.mxu0 %v477
        %585 = vmatprep.subr.mxu0 0.0
        %586 = vmatpush1.msra.mxu0 %v480
        %587 = vmatprep.subr.mxu0 0.0
        %588 = vmatpush1.msra.mxu0 %v483
        %589 = vmatprep.subr.mxu0 0.0
        %590 = vmatpush1.msra.mxu0 %v486
        %591 = vmatprep.subr.mxu0 0.0
        %592 = vmatpush1.msra.mxu0 %v489
        %593 = vmatprep.subr.mxu0 0.0
        %594 = vmatpush1.msra.mxu0 %v492
        %595 = vmatprep.subr.mxu0 0.0
        %596 = vmatpush1.msra.mxu0 %v495
        %597 = vmatprep.subr.mxu0 0.0
        %598 = vmatpush1.msra.mxu0 %v498
        %599 = vmatprep.subr.mxu0 0.0
        %600 = vmatpush1.msra.mxu0 %v501
        %601 = vmatprep.subr.mxu0 0.0
        %602 = vmatpush1.msra.mxu0 0.0
        %603 = vmatprep.subr.mxu0 0.0
        %604 = vmatpush1.msra.mxu0 0.0
        %605 = vmatprep.subr.mxu0 0.0
        %606 = vmatpush1.msra.mxu0 0.0
        %607 = vmatprep.subr.mxu0 0.0
        %608 = vmatpush1.msra.mxu0 0.0
        %609 = vmatprep.subr.mxu0 0.0
        %610 = vmatpush1.msra.mxu0 0.0
        %611 = vmatprep.subr.mxu0 0.0
        %612 = vmatpush1.msra.mxu0 0.0
        %613 = vmatprep.subr.mxu0 0.0
        %614 = vmatpush1.msra.mxu0 0.0
        %615 = vmatprep.subr.mxu0 0.0
        %616 = vmatpush1.msra.mxu0 0.0
        %617 = vmatprep.subr.mxu0 0.0
        %618 = vmatpush1.msra.mxu0 0.0
        %619 = vmatprep.subr.mxu0 0.0
        %620 = vmatpush1.msra.mxu0 0.0
        %621 = vmatprep.subr.mxu0 0.0
        %622 = vmatpush1.msra.mxu0 0.0
        %623 = vmatprep.subr.mxu0 0.0
        %624 = vmatpush1.msra.mxu0 0.0
        %625 = vmatprep.subr.mxu0 0.0
        %626 = vmatpush1.msra.mxu0 0.0
        %627 = vmatprep.subr.mxu0 0.0
        %628 = vmatpush1.msra.mxu0 0.0
        %629 = vmatprep.subr.mxu0 0.0
        %630 = vmatpush1.msra.mxu0 0.0
        %631 = vmatprep.subr.mxu0 0.0
        %632 = vmatpush1.msra.mxu0 0.0
        %633 = vmatprep.subr.mxu0 0.0
        %634 = vmatpush1.msra.mxu0 0.0
        %635 = vmatprep.subr.mxu0 0.0
        %636 = vmatpush1.msra.mxu0 0.0
        %637 = vmatprep.subr.mxu0 0.0
        %638 = vmatpush1.msra.mxu0 0.0
        %639 = vmatprep.subr.mxu0 0.0
        %640 = vmatpush1.msra.mxu0 0.0
        %641 = vmatprep.subr.mxu0 0.0
        %642 = vmatpush1.msra.mxu0 0.0
        %643 = vmatprep.subr.mxu0 0.0
        %644 = vmatpush1.msra.mxu0 0.0
        %645 = vmatprep.subr.mxu0 0.0
        %646 = vmatpush1.msra.mxu0 0.0
        %647 = vmatprep.mubr.f32.mxu0 0.0
        %648 = vmatmul.mubr.f32.gmra.mrb[0].mxu0 %v510
        %v649 = vpop.f32.mrb[0].mxu0
        %v650 = vadd.f32 %v506, %v649
        %v651 = vpop.f32.mrb[0].mxu0
        %652 = vdwg.mxu0
        %653 = vst [vmem:[%s171] sm:$0xff] %v579
        %654 = vst [vmem:[%s171 + $0x8] sm:$0xff] %v581
        %655 = vst [vmem:[%s171 + $0x10] sm:$0xff] %v650
        %s656 = sand.u32 %s100, 1
        %s657 = scalar_lea.sflag [#allocation6], %s656
        %s658 = sand.u32 %s100, 1
        %s659 = smul.addr %s658, 24
        %s660 = scalar_lea.vmem [#allocation5], %s659
        // Predicated region
        $region49: #{tpu_custom_call.1} parent=27 // pred_check
          %p661 = pneg %p110
        $region50: #{tpu_custom_call.1} parent=27 // pred_check_branch
          %663 = sbr.rel (%p661) target = $region52
        $region51: #{tpu_custom_call.1} parent=27 // pred_region
          %s664 = smul.u32 3, %s23
          %s666 = ssub.s32 384, 384
          %667 = vsyncadd %s657, %s666
          %s668 = smul.addr %s24, 3
          %s669 = sadd.s32 %s664, %s668
          %s670 = smul.addr %s22, 3
          %s671 = sadd.s32 %s669, %s670
          %s672 = smul.addr %s671, 128
          %s673 = scalar_lea.hbm %s3, %s672
          %s675 = sshll.u32 %s660, 4
          %s676 = int_to_ptr.vmem [resolvable:$true] %s675
          %678 = dma.vmem_to_hbm [thread:$0]  %s676, 384, %s673, %s657
        $region52: #{tpu_custom_call.1} parent=27 // pred_fallthru
          _
      $region28: #{tpu_custom_call.1} parent=5 // pred_fallthru
        _
      %p679 = scmp.le.s32.totalorder 2, %s12
      // Predicated region
      $region53: #{tpu_custom_call.1} parent=5 // pred_check
        %p680 = pneg %p679
      $region54: #{tpu_custom_call.1} parent=5 // pred_check_branch
        %682 = sbr.rel (%p680) target = $region56
      $region55: #{tpu_custom_call.1} parent=5 // pred_region
        %s683 = ssub.s32 %s12, 2
        // Predicated region
        $region57: #{tpu_custom_call.1} parent=55 // pred_check
          %p684 = pneg %p116
        $region58: #{tpu_custom_call.1} parent=55 // pred_check_branch
          %686 = sbr.rel (%p684) target = $region60
        $region59: #{tpu_custom_call.1} parent=55 // pred_region
          %s687 = sand.u32 %s101, 1
          %s688 = scalar_lea.sflag [#allocation6], %s687
          %s689 = sand.u32 %s101, 1
          %s690 = smul.addr %s689, 24
          %s691 = scalar_lea.vmem [#allocation5], %s690
          %692 = dma.done %s688, 384
        $region60: #{tpu_custom_call.1} parent=55 // pred_fallthru
          _
      $region56: #{tpu_custom_call.1} parent=5 // pred_fallthru
        _
    $region6: #{tpu_custom_call.1} parent=1 // loop_footer
      %s16 = sadd.s32 1, %s12
    $region7: #{tpu_custom_call.1} parent=1 // loop_footer_branch
      %11 = sbr.rel target = $region3
    $region8: #{tpu_custom_call.1} parent=1 // loop_exit
      _
    %693 = vsyncpa [#allocation6], 1
    %s694 = scalar_lea.sflag [#allocation6], 1
    %695 = vsyncpa %s694, 1
  %696 = vsyncmov [#allocation4]
  %s697 = vpop.sfrf %696
  %p698 = scmp.eq.s32.totalorder %s697, 0
  %p699 = pneg %p698
  %701 = shalt.err (%p699)
  %s702 = scalar_lea.sflag [#allocation4], 1
  %703 = vsyncmov %s702
  %s704 = vpop.sfrf %703
  %p705 = scmp.eq.s32.totalorder %s704, 0
  %p706 = pneg %p705
  %708 = shalt.err (%p706)

// kernel: tpu_custom_call.1
$region0: #{tpu_custom_call.1}
  #allocation0 [shape = 'u32[]', space=smem, size = 0x4, offset = 0x4, fixed_abs, tag = 'smem constant byte address 0x4 - core index']
  #allocation1 [shape = 'u32[144,128]{1,0:T(1,128)}', space=vmem, size = 0x12000, scoped, tag = 'internal scratch']
  #allocation2 [shape = 'f32[2,8,512]{2,1,0:T(8,128)}', space=vmem, size = 0x8000, scoped, tag = 'scratch operand']
  #allocation3 [shape = 'f32[72,384]{1,0:T(8,128)}', space=vmem, size = 0x1b000, scoped, tag = 'scratch operand']
  #allocation4 [shape = 's32[2]{0}', space=sflag, size = 0x8, scoped, tag = 'scratch operand']
  #allocation7 [shape = 's32[]', space=sflag, size = 0x4, offset = 0, fixed_abs, tag = 'sflag constant byte address 0x0 - dummy sync flag']
  #allocation8 [shape = 's32[]', space=sflag, size = 0x4, offset = 0, fixed_abs, tag = 'sflag constant byte address 0x0 - dummy sync flag']
  #allocation9 [shape = 'u32[]', space=smem, size = 0x4, offset = 0x44, fixed_abs, tag = 'smem constant byte address 0x44 - assertion arg 0']
  #allocation10 [shape = 'u32[]', space=smem, size = 0x4, offset = 0x48, fixed_abs, tag = 'smem constant byte address 0x48 - assertion arg 1']
  #allocation11 [shape = 's32[]', space=sflag, size = 0x4, offset = 0, fixed_abs, tag = 'sflag constant byte address 0x0 - dummy sync flag']
  #allocation12 [shape = 's32[]', space=sflag, size = 0x4, offset = 0, fixed_abs, tag = 'sflag constant byte address 0x0 - dummy sync flag']
  %s0 = inlined_call_operand.hbm [shape: f32[2,8,522], index: 0, kind: input, shape index: {}]
  %s1 = inlined_call_operand.vmem [shape: f32[8,72], index: 1, kind: input, shape index: {}]
  %s2 = inlined_call_operand.vmem [shape: f32[8,1], index: 2, kind: input, shape index: {}]
  %s3 = inlined_call_operand.hbm [shape: f32[2,8,384], index: 3, kind: output, shape index: {}]
  %s4 = sld [smem:[#allocation0]]
  $region61: #{tpu_custom_call.1} parent=0
    _
  %s6 = ssub.s32 1, %s4
  %s7 = scalar_select 0, %s6, %s4
  $region1: #{tpu_custom_call.1} parent=0
    #allocation5 [shape = 'u8[24576]{0}', space=vmem, size = 0x6000, scoped, tag = 'output window, operand 0']
    #allocation6 [shape = 's32[2]{0}', space=sflag, size = 0x8, scoped, tag = 'scoped memory for tpu_custom_call.1']
    %8 = vsyncpa [#allocation6], 0
    %s9 = scalar_lea.sflag [#allocation6], 1
    %10 = vsyncpa %s9, 0
    loop: start=0, step=1, limit=4
    $region2: #{tpu_custom_call.1} parent=1 // loop_pre_header
      _
    $region3: #{tpu_custom_call.1} parent=1 // loop_header
      %s12 = sphi 0, %s16
      %p13 = scmp.ge.s32.totalorder %s12, 4
      %s19 = sphi 0, %s38
      %s20 = sphi 0, %s34
      %s21 = sphi 0, %s30
      %s22 = sphi 0, %s19
      %s23 = sphi 0, %s20
      %s24 = sphi 0, %s21
      %s25 = sphi 0, %s22
      %s26 = sphi 0, %s23
      %s27 = sphi 0, %s24
      %s41 = sphi 0, %s43
      %s44 = sphi 0, %s41
      %s45 = sphi 0, %s44
      %s61 = sphi 0, %s45
      %s67 = sphi 0, %s69
      %s70 = sphi 0, %s67
      %s71 = sphi 0, %s70
      %s87 = sphi 0, %s71
      %s97 = sphi 0, %s99
      %s100 = sphi 0, %s97
      %s101 = sphi 0, %s100
      %s117 = sphi 0, %s101
    $region4: #{tpu_custom_call.1} parent=1 // loop_header_branch
      %15 = sbr.rel (%p13) target = $region8
    $region5: #{tpu_custom_call.1} parent=1 // loop_body
      %s17 = ssub.s32 %s12, 1
      %s18 = ssub.s32 %s12, 2
      %s28 = sadd.s32 1, %s21
      %p29 = scmp.ge.s32.totalorder %s28, 1
      %s30 = scalar_select %p29, 0, %s28
      %s31 = sadd.s32 1, %s20
      %s32 = scalar_select %p29, %s31, %s20
      %p33 = scmp.ge.s32.totalorder %s32, 1
      %s34 = scalar_select %p33, 0, %s32
      %s35 = sadd.s32 1, %s19
      %s36 = scalar_select %p33, %s35, %s19
      %p37 = scmp.ge.s32.totalorder %s36, 2
      %s38 = scalar_select %p37, 0, %s36
      %s39 = ssub.s32 %s21, %s30
      %p40 = scmp.eq.s32.totalorder %s39, 0
      %s42 = sadd.s32 %s41, 1
      %s43 = scalar_select %p40, %s41, %s42
      %p46 = pneg %p40
      %p47 = scmp.eq.s32.totalorder %s12, 1
      %p48 = por %p46, %p47
      %p49 = scmp.ne.s32.totalorder %s41, %s44
      %p50 = scmp.eq.s32.totalorder %s12, 0
      %p51 = por %p49, %p50
      %p52 = scmp.ne.s32.totalorder %s41, %s44
      %p53 = scmp.eq.s32.totalorder %s17, 1
      %p54 = por %p52, %p53
      %p55 = scmp.ne.s32.totalorder %s44, %s45
      %p56 = scmp.eq.s32.totalorder %s17, 0
      %p57 = por %p55, %p56
      %p58 = scmp.ne.s32.totalorder %s44, %s45
      %p59 = scmp.eq.s32.totalorder %s18, 1
      %p60 = por %p58, %p59
      %p62 = scmp.ne.s32.totalorder %s45, %s61
      %p63 = scmp.eq.s32.totalorder %s18, 0
      %p64 = por %p62, %p63
      %s65 = ssub.s32 %s21, %s30
      %p66 = scmp.eq.s32.totalorder %s65, 0
      %s68 = sadd.s32 %s67, 1
      %s69 = scalar_select %p66, %s67, %s68
      %p72 = pneg %p66
      %p73 = scmp.eq.s32.totalorder %s12, 1
      %p74 = por %p72, %p73
      %p75 = scmp.ne.s32.totalorder %s67, %s70
      %p76 = scmp.eq.s32.totalorder %s12, 0
      %p77 = por %p75, %p76
      %p78 = scmp.ne.s32.totalorder %s67, %s70
      %p79 = scmp.eq.s32.totalorder %s17, 1
      %p80 = por %p78, %p79
      %p81 = scmp.ne.s32.totalorder %s70, %s71
      %p82 = scmp.eq.s32.totalorder %s17, 0
      %p83 = por %p81, %p82
      %p84 = scmp.ne.s32.totalorder %s70, %s71
      %p85 = scmp.eq.s32.totalorder %s18, 1
      %p86 = por %p84, %p85
      %p88 = scmp.ne.s32.totalorder %s71, %s87
      %p89 = scmp.eq.s32.totalorder %s18, 0
      %p90 = por %p88, %p89
      %s91 = ssub.s32 %s19, %s38
      %s92 = ssub.s32 %s21, %s30
      %s93 = sor.u32 %s91, %s92
      %s94 = ssub.s32 %s20, %s34
      %s95 = sor.u32 %s93, %s94
      %p96 = scmp.eq.s32.totalorder %s95, 0
      %s98 = sadd.s32 %s97, 1
      %s99 = scalar_select %p96, %s97, %s98
      %p102 = pneg %p96
      %p103 = scmp.eq.s32.totalorder %s12, 1
      %p104 = por %p102, %p103
      %p105 = scmp.ne.s32.totalorder %s97, %s100
      %p106 = scmp.eq.s32.totalorder %s12, 0
      %p107 = por %p105, %p106
      %p108 = scmp.ne.s32.totalorder %s97, %s100
      %p109 = scmp.eq.s32.totalorder %s17, 1
      %p110 = por %p108, %p109
      %p111 = scmp.ne.s32.totalorder %s100, %s101
      %p112 = scmp.eq.s32.totalorder %s17, 0
      %p113 = por %p111, %p112
      %p114 = scmp.ne.s32.totalorder %s100, %s101
      %p115 = scmp.eq.s32.totalorder %s18, 1
      %p116 = por %p114, %p115
      %p118 = scmp.ne.s32.totalorder %s101, %s117
      %p119 = scmp.eq.s32.totalorder %s18, 0
      %p120 = por %p118, %p119
      %p121 = scmp.le.s32.totalorder 1, %s12
      %p122 = scmp.lt.s32.totalorder %s12, 3
      %p123 = pnand %p121, %p122
      %p124 = pneg %p123
      // Predicated region
      $region9: #{tpu_custom_call.1} parent=5 // pred_check
        _
      $region10: #{tpu_custom_call.1} parent=5 // pred_check_branch
        %126 = sbr.rel (%p123) target = $region12
      $region11: #{tpu_custom_call.1} parent=5 // pred_region
        %s127 = ssub.s32 %s12, 1
        // Predicated region
        $region13: #{tpu_custom_call.1} parent=11 // pred_check
          %p128 = pneg %p57
        $region14: #{tpu_custom_call.1} parent=11 // pred_check_branch
          %130 = sbr.rel (%p128) target = $region16
        $region15: #{tpu_custom_call.1} parent=11 // pred_region
          %p131 = scmp.lt.s32.totalorder %s24, 0
          %s132 = scalar_select %p131, %s24, 0
          %s133 = smul.addr %s132, 8
          %s134 = scalar_lea.vmem %s1, %s133
        $region16: #{tpu_custom_call.1} parent=11 // pred_fallthru
          _
        // Predicated region
        $region17: #{tpu_custom_call.1} parent=11 // pred_check
          %p135 = pneg %p83
        $region18: #{tpu_custom_call.1} parent=11 // pred_check_branch
          %137 = sbr.rel (%p135) target = $region20
        $region19: #{tpu_custom_call.1} parent=11 // pred_region
          %p138 = scmp.lt.s32.totalorder %s24, 0
          %s139 = scalar_select %p138, %s24, 0
          %s140 = smul.addr %s139, 8
          %s141 = scalar_lea.vmem %s2, %s140
        $region20: #{tpu_custom_call.1} parent=11 // pred_fallthru
          _
      $region12: #{tpu_custom_call.1} parent=5 // pred_fallthru
        _
      %p142 = scmp.lt.s32.totalorder %s12, 2
      // Predicated region
      $region21: #{tpu_custom_call.1} parent=5 // pred_check
        %p143 = pneg %p142
      $region22: #{tpu_custom_call.1} parent=5 // pred_check_branch
        %145 = sbr.rel (%p143) target = $region24
      $region23: #{tpu_custom_call.1} parent=5 // pred_region
        _
      $region24: #{tpu_custom_call.1} parent=5 // pred_fallthru
        _
      %p146 = scmp.le.s32.totalorder 1, %s12
      %p147 = scmp.lt.s32.totalorder %s12, 3
      %p148 = pnand %p146, %p147
      %p149 = pneg %p148
      // Predicated region
      $region25: #{tpu_custom_call.1} parent=5 // pred_check
        _
      $region26: #{tpu_custom_call.1} parent=5 // pred_check_branch
        %151 = sbr.rel (%p148) target = $region28
      $region27: #{tpu_custom_call.1} parent=5 // pred_region
        %s152 = ssub.s32 %s12, 1
        %p153 = scmp.lt.s32.totalorder %s24, 0
        %s154 = scalar_select %p153, %s24, 0
        %s155 = smul.addr %s154, 8
        %s156 = scalar_lea.vmem %s1, %s155
        %p157 = pneg %p57
        %p158 = pneg %p54
        %p159 = scmp.lt.s32.totalorder %s24, 0
        %s160 = scalar_select %p159, %s24, 0
        %s161 = smul.addr %s160, 8
        %s162 = scalar_lea.vmem %s2, %s161
        %p163 = pneg %p83
        %p164 = pneg %p80
        %p165 = pneg %p113
        %p166 = pneg %p110
        %s167 = sand.u32 %s100, 1
        %s168 = scalar_lea.sflag [#allocation6], %s167
        %s169 = sand.u32 %s100, 1
        %s170 = smul.addr %s169, 24
        %s171 = scalar_lea.vmem [#allocation5], %s170
        %p172 = scmp.lt.s32.totalorder %s24, 0
        %s173 = scalar_select %p172, %s24, 0
        %s174 = smul.addr %s173, 8
        %s175 = scalar_lea.vmem %s1, %s174
        %p176 = scmp.lt.s32.totalorder %s24, 0
        %s177 = scalar_select %p176, %s24, 0
        %s178 = smul.addr %s177, 8
        %s179 = scalar_lea.vmem %s2, %s178
        %s180 = smul.u32 3, %s23
        %p181 = scmp.lt.s32.totalorder %s23, 0
        %s182 = ssub.s32 0, %s23
        %s183 = scalar_select %p181, %s182, %s23
        %s184 = sand.u32 %s183, 1
        %s185 = ssub.s32 0, %s184
        %s186 = scalar_select %p181, %s185, %s184
        %p187 = scmp.ne.s32.totalorder %s186, 0
        %p188 = scmp.lt.s32.totalorder %s186, 0
        %p189 = pnand %p188, %p187
        %p190 = pneg %p189
        %s191 = sadd.s32 %s186, 2
        %s192 = scalar_select %p190, %s191, %s186
        %s193 = smul.u32 %s23, 384
        %p194 = scmp.eq.s32.totalorder %s23, 0
        %p195 = scmp.eq.s32.totalorder %s24, 0
        %p196 = pnand %p194, %p195
        %p197 = pneg %p196
        // Predicated region
        $region29: #{tpu_custom_call.1} parent=27 // pred_check
          _
        $region30: #{tpu_custom_call.1} parent=27 // pred_check_branch
          %199 = sbr.rel (%p196) target = $region32
        $region31: #{tpu_custom_call.1} parent=27 // pred_region
          %s200 = sshra.s32 %s193, 7
          %s201 = sand.u32 %s193, 127
          %s202 = smul.u32 %s22, 5
          %s203 = sadd.s32 %s200, %s202
          %s204 = smul.addr %s203, 128
          %s205 = scalar_lea.hbm %s0, %s204
          %s206 = smul.u32 %s192, 4
          %s207 = smul.addr %s206, 8
          %s208 = scalar_lea.vmem [#allocation2], %s207
          %s209 = scalar_lea.sflag [#allocation4], %s192
          // Predicated region
          $region33: #{tpu_custom_call.1} parent=31 // pred_check
            _
          $region34: #{tpu_custom_call.1} parent=31 // pred_check_branch
            %211 = sbr.rel target = $region36
          $region35: #{tpu_custom_call.1} parent=31 // pred_region
            %212 = sst [smem:[#allocation9]] [#allocation8]
            %213 = sst [smem:[#allocation10]] [#allocation7]
          $region36: #{tpu_custom_call.1} parent=31 // pred_fallthru
            _
          %215 = shalt.err (0)
          %s217 = sshll.u32 %s208, 4
          %s218 = int_to_ptr.vmem [resolvable:$true] %s217
          %220 = dma.hbm_to_vmem [thread:$0]  %s205, 512, %s218, %s209
        $region32: #{tpu_custom_call.1} parent=27 // pred_fallthru
          _
        // Predicated region
        $region37: #{tpu_custom_call.1} parent=27 // pred_check
          %p221 = pneg %p195
        $region38: #{tpu_custom_call.1} parent=27 // pred_check_branch
          %223 = sbr.rel (%p221) target = $region40
        $region39: #{tpu_custom_call.1} parent=27 // pred_region
          %s224 = smul.u32 %s192, 4
          %s225 = smul.addr %s224, 8
          %s226 = scalar_lea.vmem [#allocation2], %s225
          %s227 = scalar_lea.sflag [#allocation4], %s192
          %s228 = smul.u32 8, 1
          %s229 = smul.u32 %s228, 4
          %s230 = sshll.u32 %s229, 4
          %231 = dma.done %s227, %s230
          %s232 = sadd.s32 %s23, 1
          %p233 = scmp.lt.s32.totalorder %s232, 1
          // Predicated region
          $region41: #{tpu_custom_call.1} parent=39 // pred_check
            %p234 = pneg %p233
          $region42: #{tpu_custom_call.1} parent=39 // pred_check_branch
            %236 = sbr.rel (%p234) target = $region44
          $region43: #{tpu_custom_call.1} parent=39 // pred_region
            %s237 = sadd.s32 %s193, 384
            %s238 = ssub.s32 1, %s192
            %s239 = sshra.s32 %s237, 7
            %s240 = sand.u32 %s237, 127
            %s241 = smul.u32 %s22, 5
            %s242 = sadd.s32 %s239, %s241
            %s243 = smul.addr %s242, 128
            %s244 = scalar_lea.hbm %s0, %s243
            %s245 = smul.u32 %s238, 4
            %s246 = smul.addr %s245, 8
            %s247 = scalar_lea.vmem [#allocation2], %s246
            %s248 = scalar_lea.sflag [#allocation4], %s238
            // Predicated region
            $region45: #{tpu_custom_call.1} parent=43 // pred_check
              _
            $region46: #{tpu_custom_call.1} parent=43 // pred_check_branch
              %250 = sbr.rel target = $region48
            $region47: #{tpu_custom_call.1} parent=43 // pred_region
              %251 = sst [smem:[#allocation9]] [#allocation12]
              %252 = sst [smem:[#allocation10]] [#allocation11]
            $region48: #{tpu_custom_call.1} parent=43 // pred_fallthru
              _
            %254 = shalt.err (0)
            %s256 = sshll.u32 %s247, 4
            %s257 = int_to_ptr.vmem [resolvable:$true] %s256
            %259 = dma.hbm_to_vmem [thread:$0]  %s244, 512, %s257, %s248
          $region44: #{tpu_custom_call.1} parent=39 // pred_fallthru
            _
          %v260 = vld [vmem:[%s226] sm:$0xff]
          %v261 = vld [vmem:[%s226 + $0x8] sm:$0xff]
          %v262 = vld [vmem:[%s226 + $0x10] sm:$0xff]
          %263 = vst [vmem:[#allocation3] sm:$0xff] %v260
          %264 = vst [vmem:[#allocation3 + $0x8] sm:$0xff] %v261
          %265 = vst [vmem:[#allocation3 + $0x10] sm:$0xff] %v262
          %v266 = vld [vmem:[%s226] sm:$0xff]
          %v267 = vld [vmem:[%s226 + $0x8] sm:$0xff]
          %v268 = vld [vmem:[%s226 + $0x10] sm:$0xff]
          %v269 = vld [vmem:[%s226 + $0x18] sm:$0xff]
          %274 = vrot.lane.b32.xlu0 %v266, 127
          %v275 = vpop.permute.xlu0 %274
          %276 = vrot.lane.b32.xlu0 %v267, 127
          %v277 = vpop.permute.xlu0 %276
          %278 = vrot.lane.b32.xlu0 %v268, 127
          %v279 = vpop.permute.xlu0 %278
          %280 = vrot.lane.b32.xlu0 %v269, 127
          %v281 = vpop.permute.xlu0 %280
          %vm282 = vcmask 1039360
          %v283 = vsel %vm282, %v275, %v277
          %v284 = vsel %vm282, %v277, %v279
          %v285 = vsel %vm282, %v279, %v281
          %289 = vst [vmem:[#allocation3 + $0x18] sm:$0xff] %v283
          %290 = vst [vmem:[#allocation3 + $0x20] sm:$0xff] %v284
          %291 = vst [vmem:[#allocation3 + $0x28] sm:$0xff] %v285
          %v292 = vld [vmem:[%s226] sm:$0xff]
          %v293 = vld [vmem:[%s226 + $0x8] sm:$0xff]
          %v294 = vld [vmem:[%s226 + $0x10] sm:$0xff]
          %v295 = vld [vmem:[%s226 + $0x18] sm:$0xff]
          %300 = vrot.lane.b32.xlu0 %v292, 126
          %v301 = vpop.permute.xlu0 %300
          %302 = vrot.lane.b32.xlu0 %v293, 126
          %v303 = vpop.permute.xlu0 %302
          %304 = vrot.lane.b32.xlu0 %v294, 126
          %v305 = vpop.permute.xlu0 %304
          %306 = vrot.lane.b32.xlu0 %v295, 126
          %v307 = vpop.permute.xlu0 %306
          %vm308 = vcmask 1031168
          %v309 = vsel %vm308, %v301, %v303
          %v310 = vsel %vm308, %v303, %v305
          %v311 = vsel %vm308, %v305, %v307
          %315 = vst [vmem:[#allocation3 + $0x30] sm:$0xff] %v309
          %316 = vst [vmem:[#allocation3 + $0x38] sm:$0xff] %v310
          %317 = vst [vmem:[#allocation3 + $0x40] sm:$0xff] %v311
          %v318 = vld [vmem:[%s226] sm:$0xff]
          %v319 = vld [vmem:[%s226 + $0x8] sm:$0xff]
          %v320 = vld [vmem:[%s226 + $0x10] sm:$0xff]
          %v321 = vld [vmem:[%s226 + $0x18] sm:$0xff]
          %326 = vrot.lane.b32.xlu0 %v318, 110
          %v327 = vpop.permute.xlu0 %326
          %328 = vrot.lane.b32.xlu0 %v319, 110
          %v329 = vpop.permute.xlu0 %328
          %330 = vrot.lane.b32.xlu0 %v320, 110
          %v331 = vpop.permute.xlu0 %330
          %332 = vrot.lane.b32.xlu0 %v321, 110
          %v333 = vpop.permute.xlu0 %332
          %vm334 = vcmask 900096
          %v335 = vsel %vm334, %v327, %v329
          %v336 = vsel %vm334, %v329, %v331
          %v337 = vsel %vm334, %v331, %v333
          %341 = vst [vmem:[#allocation3 + $0x48] sm:$0xff] %v335
          %342 = vst [vmem:[#allocation3 + $0x50] sm:$0xff] %v336
          %343 = vst [vmem:[#allocation3 + $0x58] sm:$0xff] %v337
          %v344 = vld [vmem:[%s226] sm:$0xff]
          %v345 = vld [vmem:[%s226 + $0x8] sm:$0xff]
          %v346 = vld [vmem:[%s226 + $0x10] sm:$0xff]
          %v347 = vld [vmem:[%s226 + $0x18] sm:$0xff]
          %352 = vrot.lane.b32.xlu0 %v344, 109
          %v353 = vpop.permute.xlu0 %352
          %354 = vrot.lane.b32.xlu0 %v345, 109
          %v355 = vpop.permute.xlu0 %354
          %356 = vrot.lane.b32.xlu0 %v346, 109
          %v357 = vpop.permute.xlu0 %356
          %358 = vrot.lane.b32.xlu0 %v347, 109
          %v359 = vpop.permute.xlu0 %358
          %vm360 = vcmask 891904
          %v361 = vsel %vm360, %v353, %v355
          %v362 = vsel %vm360, %v355, %v357
          %v363 = vsel %vm360, %v357, %v359
          %367 = vst [vmem:[#allocation3 + $0x60] sm:$0xff] %v361
          %368 = vst [vmem:[#allocation3 + $0x68] sm:$0xff] %v362
          %369 = vst [vmem:[#allocation3 + $0x70] sm:$0xff] %v363
          %v370 = vld [vmem:[%s226] sm:$0xff]
          %v371 = vld [vmem:[%s226 + $0x8] sm:$0xff]
          %v372 = vld [vmem:[%s226 + $0x10] sm:$0xff]
          %v373 = vld [vmem:[%s226 + $0x18] sm:$0xff]
          %378 = vrot.lane.b32.xlu0 %v370, 108
          %v379 = vpop.permute.xlu0 %378
          %380 = vrot.lane.b32.xlu0 %v371, 108
          %v381 = vpop.permute.xlu0 %380
          %382 = vrot.lane.b32.xlu0 %v372, 108
          %v383 = vpop.permute.xlu0 %382
          %384 = vrot.lane.b32.xlu0 %v373, 108
          %v385 = vpop.permute.xlu0 %384
          %vm386 = vcmask 883712
          %v387 = vsel %vm386, %v379, %v381
          %v388 = vsel %vm386, %v381, %v383
          %v389 = vsel %vm386, %v383, %v385
          %393 = vst [vmem:[#allocation3 + $0x78] sm:$0xff] %v387
          %394 = vst [vmem:[#allocation3 + $0x80] sm:$0xff] %v388
          %395 = vst [vmem:[#allocation3 + $0x88] sm:$0xff] %v389
          %v396 = vld [vmem:[%s226] sm:$0xff]
          %v397 = vld [vmem:[%s226 + $0x8] sm:$0xff]
          %v398 = vld [vmem:[%s226 + $0x10] sm:$0xff]
          %v399 = vld [vmem:[%s226 + $0x18] sm:$0xff]
          %404 = vrot.lane.b32.xlu0 %v396, 92
          %v405 = vpop.permute.xlu0 %404
          %406 = vrot.lane.b32.xlu0 %v397, 92
          %v407 = vpop.permute.xlu0 %406
          %408 = vrot.lane.b32.xlu0 %v398, 92
          %v409 = vpop.permute.xlu0 %408
          %410 = vrot.lane.b32.xlu0 %v399, 92
          %v411 = vpop.permute.xlu0 %410
          %vm412 = vcmask 752640
          %v413 = vsel %vm412, %v405, %v407
          %v414 = vsel %vm412, %v407, %v409
          %v415 = vsel %vm412, %v409, %v411
          %419 = vst [vmem:[#allocation3 + $0x90] sm:$0xff] %v413
          %420 = vst [vmem:[#allocation3 + $0x98] sm:$0xff] %v414
          %421 = vst [vmem:[#allocation3 + $0xa0] sm:$0xff] %v415
          %v422 = vld [vmem:[%s226] sm:$0xff]
          %v423 = vld [vmem:[%s226 + $0x8] sm:$0xff]
          %v424 = vld [vmem:[%s226 + $0x10] sm:$0xff]
          %v425 = vld [vmem:[%s226 + $0x18] sm:$0xff]
          %430 = vrot.lane.b32.xlu0 %v422, 91
          %v431 = vpop.permute.xlu0 %430
          %432 = vrot.lane.b32.xlu0 %v423, 91
          %v433 = vpop.permute.xlu0 %432
          %434 = vrot.lane.b32.xlu0 %v424, 91
          %v435 = vpop.permute.xlu0 %434
          %436 = vrot.lane.b32.xlu0 %v425, 91
          %v437 = vpop.permute.xlu0 %436
          %vm438 = vcmask 744448
          %v439 = vsel %vm438, %v431, %v433
          %v440 = vsel %vm438, %v433, %v435
          %v441 = vsel %vm438, %v435, %v437
          %445 = vst [vmem:[#allocation3 + $0xa8] sm:$0xff] %v439
          %446 = vst [vmem:[#allocation3 + $0xb0] sm:$0xff] %v440
          %447 = vst [vmem:[#allocation3 + $0xb8] sm:$0xff] %v441
          %v448 = vld [vmem:[%s226] sm:$0xff]
          %v449 = vld [vmem:[%s226 + $0x8] sm:$0xff]
          %v450 = vld [vmem:[%s226 + $0x10] sm:$0xff]
          %v451 = vld [vmem:[%s226 + $0x18] sm:$0xff]
          %456 = vrot.lane.b32.xlu0 %v448, 90
          %v457 = vpop.permute.xlu0 %456
          %458 = vrot.lane.b32.xlu0 %v449, 90
          %v459 = vpop.permute.xlu0 %458
          %460 = vrot.lane.b32.xlu0 %v450, 90
          %v461 = vpop.permute.xlu0 %460
          %462 = vrot.lane.b32.xlu0 %v451, 90
          %v463 = vpop.permute.xlu0 %462
          %vm464 = vcmask 736256
          %v465 = vsel %vm464, %v457, %v459
          %v466 = vsel %vm464, %v459, %v461
          %v467 = vsel %vm464, %v461, %v463
          %471 = vst [vmem:[#allocation3 + $0xc0] sm:$0xff] %v465
          %472 = vst [vmem:[#allocation3 + $0xc8] sm:$0xff] %v466
          %473 = vst [vmem:[#allocation3 + $0xd0] sm:$0xff] %v467
        $region40: #{tpu_custom_call.1} parent=27 // pred_fallthru
          _
        %v474 = vld [vmem:[%s175] sm:$0xff]
        %v475 = vld [vmem:[#allocation3] sm:$0xff]
        %v476 = vld [vmem:[#allocation3 + $0x8] sm:$0xff]
        %v477 = vld [vmem:[#allocation3 + $0x10] sm:$0xff]
        %v478 = vld [vmem:[#allocation3 + $0x18] sm:$0xff]
        %v479 = vld [vmem:[#allocation3 + $0x20] sm:$0xff]
        %v480 = vld [vmem:[#allocation3 + $0x28] sm:$0xff]
        %v481 = vld [vmem:[#allocation3 + $0x30] sm:$0xff]
        %v482 = vld [vmem:[#allocation3 + $0x38] sm:$0xff]
        %v483 = vld [vmem:[#allocation3 + $0x40] sm:$0xff]
        %v484 = vld [vmem:[#allocation3 + $0x48] sm:$0xff]
        %v485 = vld [vmem:[#allocation3 + $0x50] sm:$0xff]
        %v486 = vld [vmem:[#allocation3 + $0x58] sm:$0xff]
        %v487 = vld [vmem:[#allocation3 + $0x60] sm:$0xff]
        %v488 = vld [vmem:[#allocation3 + $0x68] sm:$0xff]
        %v489 = vld [vmem:[#allocation3 + $0x70] sm:$0xff]
        %v490 = vld [vmem:[#allocation3 + $0x78] sm:$0xff]
        %v491 = vld [vmem:[#allocation3 + $0x80] sm:$0xff]
        %v492 = vld [vmem:[#allocation3 + $0x88] sm:$0xff]
        %v493 = vld [vmem:[#allocation3 + $0x90] sm:$0xff]
        %v494 = vld [vmem:[#allocation3 + $0x98] sm:$0xff]
        %v495 = vld [vmem:[#allocation3 + $0xa0] sm:$0xff]
        %v496 = vld [vmem:[#allocation3 + $0xa8] sm:$0xff]
        %v497 = vld [vmem:[#allocation3 + $0xb0] sm:$0xff]
        %v498 = vld [vmem:[#allocation3 + $0xb8] sm:$0xff]
        %v499 = vld [vmem:[#allocation3 + $0xc0] sm:$0xff]
        %v500 = vld [vmem:[#allocation3 + $0xc8] sm:$0xff]
        %v501 = vld [vmem:[#allocation3 + $0xd0] sm:$0xff]
        %v502 = vld [vmem:[%s179] sm:$0xff]
        %504 = vset.pattern.permute.xlu0 0
        %505 = vperm.xlu0 %504, %v502
        %v506 = vpop.permute.xlu0 %505
        %vm508 = vcmask 588800
        %v510 = vsel %vm508, %v474, 0
        %512 = vmatprep.subr.mxu0 %v476
        %513 = vmatpush1.msra.mxu0 %v475
        %514 = vmatprep.subr.mxu0 %v479
        %515 = vmatpush1.msra.mxu0 %v478
        %516 = vmatprep.subr.mxu0 %v482
        %517 = vmatpush1.msra.mxu0 %v481
        %518 = vmatprep.subr.mxu0 %v485
        %519 = vmatpush1.msra.mxu0 %v484
        %520 = vmatprep.subr.mxu0 %v488
        %521 = vmatpush1.msra.mxu0 %v487
        %522 = vmatprep.subr.mxu0 %v491
        %523 = vmatpush1.msra.mxu0 %v490
        %524 = vmatprep.subr.mxu0 %v494
        %525 = vmatpush1.msra.mxu0 %v493
        %526 = vmatprep.subr.mxu0 %v497
        %527 = vmatpush1.msra.mxu0 %v496
        %528 = vmatprep.subr.mxu0 %v500
        %529 = vmatpush1.msra.mxu0 %v499
        %530 = vmatprep.subr.mxu0 0.0
        %531 = vmatpush1.msra.mxu0 0.0
        %532 = vmatprep.subr.mxu0 0.0
        %533 = vmatpush1.msra.mxu0 0.0
        %534 = vmatprep.subr.mxu0 0.0
        %535 = vmatpush1.msra.mxu0 0.0
        %536 = vmatprep.subr.mxu0 0.0
        %537 = vmatpush1.msra.mxu0 0.0
        %538 = vmatprep.subr.mxu0 0.0
        %539 = vmatpush1.msra.mxu0 0.0
        %540 = vmatprep.subr.mxu0 0.0
        %541 = vmatpush1.msra.mxu0 0.0
        %542 = vmatprep.subr.mxu0 0.0
        %543 = vmatpush1.msra.mxu0 0.0
        %544 = vmatprep.subr.mxu0 0.0
        %545 = vmatpush1.msra.mxu0 0.0
        %546 = vmatprep.subr.mxu0 0.0
        %547 = vmatpush1.msra.mxu0 0.0
        %548 = vmatprep.subr.mxu0 0.0
        %549 = vmatpush1.msra.mxu0 0.0
        %550 = vmatprep.subr.mxu0 0.0
        %551 = vmatpush1.msra.mxu0 0.0
        %552 = vmatprep.subr.mxu0 0.0
        %553 = vmatpush1.msra.mxu0 0.0
        %554 = vmatprep.subr.mxu0 0.0
        %555 = vmatpush1.msra.mxu0 0.0
        %556 = vmatprep.subr.mxu0 0.0
        %557 = vmatpush1.msra.mxu0 0.0
        %558 = vmatprep.subr.mxu0 0.0
        %559 = vmatpush1.msra.mxu0 0.0
        %560 = vmatprep.subr.mxu0 0.0
        %561 = vmatpush1.msra.mxu0 0.0
        %562 = vmatprep.subr.mxu0 0.0
        %563 = vmatpush1.msra.mxu0 0.0
        %564 = vmatprep.subr.mxu0 0.0
        %565 = vmatpush1.msra.mxu0 0.0
        %566 = vmatprep.subr.mxu0 0.0
        %567 = vmatpush1.msra.mxu0 0.0
        %568 = vmatprep.subr.mxu0 0.0
        %569 = vmatpush1.msra.mxu0 0.0
        %570 = vmatprep.subr.mxu0 0.0
        %571 = vmatpush1.msra.mxu0 0.0
        %572 = vmatprep.subr.mxu0 0.0
        %573 = vmatpush1.msra.mxu0 0.0
        %574 = vmatprep.subr.mxu0 0.0
        %575 = vmatpush1.msra.mxu0 0.0
        %576 = vmatprep.mubr.f32.mxu0 0.0
        %577 = vmatmul.mubr.f32.gmra.mrb[0].mxu0 %v510
        %v578 = vpop.f32.mrb[0].mxu0
        %v579 = vadd.f32 %v506, %v578
        %v580 = vpop.f32.mrb[0].mxu0
        %v581 = vadd.f32 %v506, %v580
        %582 = vdwg.mxu0
        %583 = vmatprep.subr.mxu0 0.0
        %584 = vmatpush1.msra.mxu0 %v477
        %585 = vmatprep.subr.mxu0 0.0
        %586 = vmatpush1.msra.mxu0 %v480
        %587 = vmatprep.subr.mxu0 0.0
        %588 = vmatpush1.msra.mxu0 %v483
        %589 = vmatprep.subr.mxu0 0.0
        %590 = vmatpush1.msra.mxu0 %v486
        %591 = vmatprep.subr.mxu0 0.0
        %592 = vmatpush1.msra.mxu0 %v489
        %593 = vmatprep.subr.mxu0 0.0
        %594 = vmatpush1.msra.mxu0 %v492
        %595 = vmatprep.subr.mxu0 0.0
        %596 = vmatpush1.msra.mxu0 %v495
        %597 = vmatprep.subr.mxu0 0.0
        %598 = vmatpush1.msra.mxu0 %v498
        %599 = vmatprep.subr.mxu0 0.0
        %600 = vmatpush1.msra.mxu0 %v501
        %601 = vmatprep.subr.mxu0 0.0
        %602 = vmatpush1.msra.mxu0 0.0
        %603 = vmatprep.subr.mxu0 0.0
        %604 = vmatpush1.msra.mxu0 0.0
        %605 = vmatprep.subr.mxu0 0.0
        %606 = vmatpush1.msra.mxu0 0.0
        %607 = vmatprep.subr.mxu0 0.0
        %608 = vmatpush1.msra.mxu0 0.0
        %609 = vmatprep.subr.mxu0 0.0
        %610 = vmatpush1.msra.mxu0 0.0
        %611 = vmatprep.subr.mxu0 0.0
        %612 = vmatpush1.msra.mxu0 0.0
        %613 = vmatprep.subr.mxu0 0.0
        %614 = vmatpush1.msra.mxu0 0.0
        %615 = vmatprep.subr.mxu0 0.0
        %616 = vmatpush1.msra.mxu0 0.0
        %617 = vmatprep.subr.mxu0 0.0
        %618 = vmatpush1.msra.mxu0 0.0
        %619 = vmatprep.subr.mxu0 0.0
        %620 = vmatpush1.msra.mxu0 0.0
        %621 = vmatprep.subr.mxu0 0.0
        %622 = vmatpush1.msra.mxu0 0.0
        %623 = vmatprep.subr.mxu0 0.0
        %624 = vmatpush1.msra.mxu0 0.0
        %625 = vmatprep.subr.mxu0 0.0
        %626 = vmatpush1.msra.mxu0 0.0
        %627 = vmatprep.subr.mxu0 0.0
        %628 = vmatpush1.msra.mxu0 0.0
        %629 = vmatprep.subr.mxu0 0.0
        %630 = vmatpush1.msra.mxu0 0.0
        %631 = vmatprep.subr.mxu0 0.0
        %632 = vmatpush1.msra.mxu0 0.0
        %633 = vmatprep.subr.mxu0 0.0
        %634 = vmatpush1.msra.mxu0 0.0
        %635 = vmatprep.subr.mxu0 0.0
        %636 = vmatpush1.msra.mxu0 0.0
        %637 = vmatprep.subr.mxu0 0.0
        %638 = vmatpush1.msra.mxu0 0.0
        %639 = vmatprep.subr.mxu0 0.0
        %640 = vmatpush1.msra.mxu0 0.0
        %641 = vmatprep.subr.mxu0 0.0
        %642 = vmatpush1.msra.mxu0 0.0
        %643 = vmatprep.subr.mxu0 0.0
        %644 = vmatpush1.msra.mxu0 0.0
        %645 = vmatprep.subr.mxu0 0.0
        %646 = vmatpush1.msra.mxu0 0.0
        %647 = vmatprep.mubr.f32.mxu0 0.0
        %648 = vmatmul.mubr.f32.gmra.mrb[0].mxu0 %v510
        %v649 = vpop.f32.mrb[0].mxu0
        %v650 = vadd.f32 %v506, %v649
        %v651 = vpop.f32.mrb[0].mxu0
        %652 = vdwg.mxu0
        %653 = vst [vmem:[%s171] sm:$0xff] %v579
        %654 = vst [vmem:[%s171 + $0x8] sm:$0xff] %v581
        %655 = vst [vmem:[%s171 + $0x10] sm:$0xff] %v650
        %s656 = sand.u32 %s100, 1
        %s657 = scalar_lea.sflag [#allocation6], %s656
        %s658 = sand.u32 %s100, 1
        %s659 = smul.addr %s658, 24
        %s660 = scalar_lea.vmem [#allocation5], %s659
        // Predicated region
        $region49: #{tpu_custom_call.1} parent=27 // pred_check
          %p661 = pneg %p110
        $region50: #{tpu_custom_call.1} parent=27 // pred_check_branch
          %663 = sbr.rel (%p661) target = $region52
        $region51: #{tpu_custom_call.1} parent=27 // pred_region
          %s664 = smul.u32 3, %s23
          %s666 = ssub.s32 384, 384
          %667 = vsyncadd %s657, %s666
          %s668 = smul.addr %s24, 3
          %s669 = sadd.s32 %s664, %s668
          %s670 = smul.addr %s22, 3
          %s671 = sadd.s32 %s669, %s670
          %s672 = smul.addr %s671, 128
          %s673 = scalar_lea.hbm %s3, %s672
          %s675 = sshll.u32 %s660, 4
          %s676 = int_to_ptr.vmem [resolvable:$true] %s675
          %678 = dma.vmem_to_hbm [thread:$0]  %s676, 384, %s673, %s657
        $region52: #{tpu_custom_call.1} parent=27 // pred_fallthru
          _
      $region28: #{tpu_custom_call.1} parent=5 // pred_fallthru
        _
      %p679 = scmp.le.s32.totalorder 2, %s12
      // Predicated region
      $region53: #{tpu_custom_call.1} parent=5 // pred_check
        %p680 = pneg %p679
      $region54: #{tpu_custom_call.1} parent=5 // pred_check_branch
        %682 = sbr.rel (%p680) target = $region56
      $region55: #{tpu_custom_call.1} parent=5 // pred_region
        %s683 = ssub.s32 %s12, 2
        // Predicated region
        $region57: #{tpu_custom_call.1} parent=55 // pred_check
          %p684 = pneg %p116
        $region58: #{tpu_custom_call.1} parent=55 // pred_check_branch
          %686 = sbr.rel (%p684) target = $region60
        $region59: #{tpu_custom_call.1} parent=55 // pred_region
          %s687 = sand.u32 %s101, 1
          %s688 = scalar_lea.sflag [#allocation6], %s687
          %s689 = sand.u32 %s101, 1
          %s690 = smul.addr %s689, 24
          %s691 = scalar_lea.vmem [#allocation5], %s690
          %692 = dma.done %s688, 384
        $region60: #{tpu_custom_call.1} parent=55 // pred_fallthru
          _
      $region56: #{tpu_custom_call.1} parent=5 // pred_fallthru
        _
    $region6: #{tpu_custom_call.1} parent=1 // loop_footer
      %s16 = sadd.s32 1, %s12
    $region7: #{tpu_custom_call.1} parent=1 // loop_footer_branch
      %11 = sbr.rel target = $region3
    $region8: #{tpu_custom_call.1} parent=1 // loop_exit
      _
    %693 = vsyncpa [#allocation6], 1
    %s694 = scalar_lea.sflag [#allocation6], 1
    %695 = vsyncpa %s694, 1
  %696 = vsyncmov [#allocation4]
  %s697 = vpop.sfrf %696
  %p698 = scmp.eq.s32.totalorder %s697, 0
  %p699 = pneg %p698
  %701 = shalt.err (%p699)
  %s702 = scalar_lea.sflag [#allocation4], 1
  %703 = vsyncmov %s702
  %s704 = vpop.sfrf %703
  %p705 = scmp.eq.s32.totalorder %s704, 0
  %p706 = pneg %p705
  %708 = shalt.err (%p706)

</llo_original>
